<compile_context>
chip_gen: v7x
topology: tpu7x:2x2x1
jax: 0.10.0
libtpu: 0.0.40
codegen_flags: <defaults>
</compile_context>

<pallas_src>
import functools

import jax
import jax.numpy as jnp
from jax.experimental import pallas as pl
from jax.experimental.pallas import tpu as pltpu


def _round_up(x, m):
    return (x + m - 1) // m * m


def _lstm_chunk_kernel(gx_ref, whh_ref, h_out_ref, c_out_ref, h_scr, c_scr,
                       *, seq_len, mask_tail):
    """One (batch_tile, time_chunk) grid step of the LSTM recurrence.

    gx_ref   : (Tc, Bt, 4*Hp)  precomputed x_t @ W_ih^T + bias
    whh_ref  : (Hp, 4*Hp)      recurrent weights (gate blocks lane-padded)
    h_out_ref, c_out_ref : (1, Bt, Hp)  written on the last time chunk
    h_scr, c_scr         : (Bt, Hp)     recurrent state, resident across chunks
    """
    chunk = pl.program_id(1)
    tc = gx_ref.shape[0]
    hp = whh_ref.shape[0]

    @pl.when(chunk == 0)
    def _():
        h_scr[...] = jnp.zeros_like(h_scr)
        c_scr[...] = jnp.zeros_like(c_scr)

    whh = whh_ref[...]
    base = chunk * tc

    def step(i, carry):
        h, c = carry
        gates = gx_ref[i] + jnp.dot(h, whh, preferred_element_type=jnp.float32)
        i_g = jax.nn.sigmoid(gates[:, 0 * hp:1 * hp])
        f_g = jax.nn.sigmoid(gates[:, 1 * hp:2 * hp])
        g_g = jnp.tanh(gates[:, 2 * hp:3 * hp])
        o_g = jax.nn.sigmoid(gates[:, 3 * hp:4 * hp])
        c_new = f_g * c + i_g * g_g
        h_new = o_g * jnp.tanh(c_new)
        if mask_tail:  # static flag: only emitted when S was padded along time
            valid = (base + i) < seq_len
            h_new = jnp.where(valid, h_new, h)
            c_new = jnp.where(valid, c_new, c)
        return h_new, c_new

    h_fin, c_fin = jax.lax.fori_loop(0, tc, step,
                                     (h_scr[...], c_scr[...]), unroll=True)
    h_scr[...] = h_fin
    c_scr[...] = c_fin

    @pl.when(chunk == pl.num_programs(1) - 1)
    def _():
        h_out_ref[0] = h_fin
        c_out_ref[0] = c_fin


def lstm_forward(gates_x, w_hh_t_p, *, time_chunk=32, batch_tile=128):
    """Runs the LSTM recurrence over precomputed input gates.

    gates_x  : (S, B, 4*Hp) f32 -- x_t @ W_ih^T + bias (gate blocks lane-padded)
    w_hh_t_p : (Hp, 4*Hp)   f32 -- recurrent weights, padded the same way
    Returns (h_n, c_n), each (1, B_pad, Hp); caller slices to (1, B, H).
    """
    S, B, g4 = gates_x.shape
    hp = w_hh_t_p.shape[0]
    assert g4 == 4 * hp

    bt = min(batch_tile, _round_up(B, 8))       # sublane-aligned batch tile
    b_pad = _round_up(B, bt)
    tc = min(time_chunk, S)                     # timesteps per grid step
    s_pad = _round_up(S, tc)

    gates_x = jnp.pad(gates_x, ((0, s_pad - S), (0, b_pad - B), (0, 0)))

    nb = b_pad // bt
    nc = s_pad // tc

    kernel = functools.partial(_lstm_chunk_kernel,
                               seq_len=S, mask_tail=(s_pad != S))

    grid_spec = pltpu.PrefetchScalarGridSpec(
        num_scalar_prefetch=0,
        grid=(nb, nc),
        in_specs=[
            pl.BlockSpec((tc, bt, g4), lambda b, c: (c, b, 0)),   # gates_x chunk
            pl.BlockSpec((hp, g4), lambda b, c: (0, 0)),          # W_hh^T (resident)
        ],
        out_specs=[
            pl.BlockSpec((1, bt, hp), lambda b, c: (0, b, 0)),    # h_n tile
            pl.BlockSpec((1, bt, hp), lambda b, c: (0, b, 0)),    # c_n tile
        ],
        scratch_shapes=[
            pltpu.VMEM((bt, hp), jnp.float32),                    # h state
            pltpu.VMEM((bt, hp), jnp.float32),                    # c state
        ],
    )

    h_n, c_n = pl.pallas_call(
        kernel,
        grid_spec=grid_spec,
        out_shape=(jax.ShapeDtypeStruct((1, b_pad, hp), jnp.float32),
                   jax.ShapeDtypeStruct((1, b_pad, hp), jnp.float32)),
        compiler_params=pltpu.CompilerParams(
            # Batch tiles are independent (megacore-shardable on v7x);
            # the time axis is a recurrence and must stay "arbitrary".
            dimension_semantics=("parallel", "arbitrary")),
    )(gates_x, w_hh_t_p)
    return h_n, c_n


class EncoderPallas:
    """Deterministically-initialized Embedding + 1-layer LSTM encoder."""

    def __init__(self, embedding_size, hidden_size, voc_len, num_layers=1,
                 key=jax.random.PRNGKey(0)):
        assert num_layers == 1
        self.embedding_size = embedding_size
        self.hidden_size = hidden_size
        self.voc_len = voc_len

        k_emb, k_ih, k_hh, k_bih, k_bhh = jax.random.split(key, 5)
        # nn.init.normal_ on every parameter (std=1), matching the module init.
        self.embedding = jax.random.normal(
            k_emb, (voc_len, embedding_size), jnp.float32)
        w_ih = jax.random.normal(
            k_ih, (4 * hidden_size, embedding_size), jnp.float32)
        w_hh = jax.random.normal(
            k_hh, (4 * hidden_size, hidden_size), jnp.float32)
        b_ih = jax.random.normal(k_bih, (4 * hidden_size,), jnp.float32)
        b_hh = jax.random.normal(k_bhh, (4 * hidden_size,), jnp.float32)

        # Unpadded (PyTorch-equivalent) parameters, gate order [i | f | g | o].
        self.w_ih_t = w_ih.T                                   # (E, 4H)
        self.w_hh_t = w_hh.T                                   # (H, 4H)
        self.bias = b_ih + b_hh                                # (4H,)

        # Lane-aligned padded layouts: each gate block padded H -> Hp=ceil128(H),
        # hidden (contraction) axis of W_hh^T zero-padded H -> Hp.  Zero padding
        # keeps the real lanes numerically identical to the unpadded math.
        H = hidden_size
        hp = _round_up(H, 128)
        self.hidden_pad = hp

        def pad_gate_cols(m):                                  # (..., 4H) -> (..., 4Hp)
            blocks = jnp.split(m, 4, axis=-1)
            pad = [(0, 0)] * (m.ndim - 1) + [(0, hp - H)]
            return jnp.concatenate([jnp.pad(b, pad) for b in blocks], axis=-1)

        self.w_ih_t_p = pad_gate_cols(self.w_ih_t)             # (E, 4Hp)
        self.w_hh_t_p = jnp.pad(pad_gate_cols(self.w_hh_t),
                                ((0, hp - H), (0, 0)))         # (Hp, 4Hp)
        self.bias_p = pad_gate_cols(self.bias.reshape(1, 4 * H))  # (1, 4Hp)

    def __call__(self, input_seq):
        # input_seq: (S, B) int32 token indices (seq-major, batch_first=False).
        S, B = input_seq.shape
        H = self.hidden_size

        # Embedding gather + hoisted, time-independent input projection as one
        # big MXU-friendly matmul (XLA glue, as recommended by the review).
        seq_embedded = self.embedding[input_seq]               # (S, B, E)
        gates_x = (jnp.einsum('sbe,eg->sbg', seq_embedded, self.w_ih_t_p)
                   + self.bias_p)                              # (S, B, 4Hp)

        h_p, c_p = lstm_forward(gates_x, self.w_hh_t_p)
        return h_p[:, :B, :H], c_p[:, :B, :H]                  # (1, B, H) each


def _reference(enc, input_seq):
    """Pure-JAX LSTM reference (same equations) for a sanity check."""
    seq_embedded = enc.embedding[input_seq]
    H = enc.hidden_size
    B = input_seq.shape[1]

    def step(carry, x):
        h, c = carry
        gates = x @ enc.w_ih_t + h @ enc.w_hh_t + enc.bias
        i = jax.nn.sigmoid(gates[:, 0 * H:1 * H])
        f = jax.nn.sigmoid(gates[:, 1 * H:2 * H])
        g = jnp.tanh(gates[:, 2 * H:3 * H])
        o = jax.nn.sigmoid(gates[:, 3 * H:4 * H])
        c = f * c + i * g
        h = o * jnp.tanh(c)
        return (h, c), None

    init = (jnp.zeros((B, H), jnp.float32), jnp.zeros((B, H), jnp.float32))
    (h, c), _ = jax.lax.scan(step, init, seq_embedded)
    return h[None], c[None]


if __name__ == "__main__":
    embedding_size, hidden_size, voc_len = 16, 32, 50
    seq_len, batch = 8, 4

    enc = EncoderPallas(embedding_size, hidden_size, voc_len,
                        key=jax.random.PRNGKey(0))

    key_in = jax.random.PRNGKey(1)
    input_seq = jax.random.randint(key_in, (seq_len, batch), 0, voc_len,
                                   dtype=jnp.int32)

    h_n, c_n = enc(input_seq)
    jax.block_until_ready((h_n, c_n))

    h_ref, c_ref = _reference(enc, input_seq)
    assert h_n.shape == (1, batch, hidden_size)
    assert c_n.shape == (1, batch, hidden_size)
    assert jnp.allclose(h_n, h_ref, atol=1e-4, rtol=1e-4)
    assert jnp.allclose(c_n, c_ref, atol=1e-4, rtol=1e-4)

    print("KERNEL_OK")
</pallas_src>

<mosaic_0001>
module attributes {stable_mosaic.version = 11 : i64} {
  func.func @_lstm_chunk_kernel(%arg0: i32, %arg1: i32, %arg2: memref<8x8x512xf32, #tpu.memory_space<vmem>>, %arg3: memref<128x512xf32, #tpu.memory_space<vmem>>, %arg4: memref<1x8x128xf32, #tpu.memory_space<vmem>>, %arg5: memref<1x8x128xf32, #tpu.memory_space<vmem>>, %arg6: memref<8x128xf32, #tpu.memory_space<vmem>>, %arg7: memref<8x128xf32, #tpu.memory_space<vmem>>) attributes {dimension_semantics = [#tpu.dimension_semantics<parallel>, #tpu.dimension_semantics<arbitrary>], iteration_bounds = array<i64: 1, 1>, scalar_prefetch = 0 : i64, scratch_operands = 2 : i64, tpu.core_type = #tpu.core_type<tc>, window_params = [{transform_indices = @transform_0, window_bounds = array<i64: 8, 8, 512>}, {pipeline_mode = #tpu.pipeline_mode<synchronous>, transform_indices = @transform_1, window_bounds = array<i64: 128, 512>}, {transform_indices = @transform_2, window_bounds = array<i64: 1, 8, 128>}, {transform_indices = @transform_3, window_bounds = array<i64: 1, 8, 128>}]} {
    %c0_i32 = arith.constant 0 : i32
    %0 = arith.cmpi eq, %arg1, %c0_i32 : i32
    %1 = arith.extui %0 : i1 to i32
    %c0_i32_0 = arith.constant 0 : i32
    %2 = arith.cmpi ne, %1, %c0_i32_0 : i32
    scf.if %2 {
      %cst_60 = arith.constant 0.000000e+00 : f32
      %251 = vector.broadcast %cst_60 : f32 to vector<8x128xf32>
      %c0_61 = arith.constant 0 : index
      %c0_62 = arith.constant 0 : index
      %252 = vector.load %arg6[%c0_61, %c0_62] : memref<8x128xf32, #tpu.memory_space<vmem>>, vector<8x128xf32>
      tpu.vector_store %arg6[%c0_61, %c0_62], %251 {strides = array<i32>} : memref<8x128xf32, #tpu.memory_space<vmem>>, vector<8x128xf32>,
      %cst_63 = arith.constant 0.000000e+00 : f32
      %253 = vector.broadcast %cst_63 : f32 to vector<8x128xf32>
      %c0_64 = arith.constant 0 : index
      %c0_65 = arith.constant 0 : index
      %254 = vector.load %arg7[%c0_64, %c0_65] : memref<8x128xf32, #tpu.memory_space<vmem>>, vector<8x128xf32>
      tpu.vector_store %arg7[%c0_64, %c0_65], %253 {strides = array<i32>} : memref<8x128xf32, #tpu.memory_space<vmem>>, vector<8x128xf32>,
    } else {
    }
    %c0 = arith.constant 0 : index
    %c0_1 = arith.constant 0 : index
    %3 = vector.load %arg3[%c0, %c0_1] : memref<128x512xf32, #tpu.memory_space<vmem>>, vector<128x512xf32>
    %c0_2 = arith.constant 0 : index
    %c0_3 = arith.constant 0 : index
    %4 = vector.load %arg6[%c0_2, %c0_3] : memref<8x128xf32, #tpu.memory_space<vmem>>, vector<8x128xf32>
    %c0_4 = arith.constant 0 : index
    %c0_5 = arith.constant 0 : index
    %5 = vector.load %arg7[%c0_4, %c0_5] : memref<8x128xf32, #tpu.memory_space<vmem>>, vector<8x128xf32>
    %c0_i32_6 = arith.constant 0 : i32
    %6 = arith.index_cast %c0_i32_6 : i32 to index
    %c0_7 = arith.constant 0 : index
    %c0_8 = arith.constant 0 : index
    %7 = vector.load %arg2[%6, %c0_7, %c0_8] : memref<8x8x512xf32, #tpu.memory_space<vmem>>, vector<1x8x512xf32>
    %8 = vector.shape_cast %7 : vector<1x8x512xf32> to vector<8x512xf32>
    %cst = arith.constant dense<0.000000e+00> : vector<8x512xf32>
    %9 = tpu.matmul %4, %3, %cst {dimension_numbers = #tpu.dot_dimension_numbers<[1], [0], [0], [1], [0, 0, 1, 1], [], []>} : vector<8x128xf32>, vector<128x512xf32>, vector<8x512xf32> -> vector<8x512xf32>
    %10 = arith.addf %8, %9 : vector<8x512xf32>
    %11 = vector.extract_strided_slice %10 {offsets = [0, 0], sizes = [8, 128], strides = [1, 1]} : vector<8x512xf32> to vector<8x128xf32>
    %12 = arith.negf %11 : vector<8x128xf32>
    %13 = math.exp %12 : vector<8x128xf32>
    %cst_9 = arith.constant 1.000000e+00 : f32
    %14 = vector.broadcast %cst_9 : f32 to vector<8x128xf32>
    %15 = arith.addf %14, %13 : vector<8x128xf32>
    %16 = arith.divf %14, %15 : vector<8x128xf32>
    %17 = vector.extract_strided_slice %10 {offsets = [0, 128], sizes = [8, 128], strides = [1, 1]} : vector<8x512xf32> to vector<8x128xf32>
    %18 = arith.negf %17 : vector<8x128xf32>
    %19 = math.exp %18 : vector<8x128xf32>
    %cst_10 = arith.constant 1.000000e+00 : f32
    %20 = vector.broadcast %cst_10 : f32 to vector<8x128xf32>
    %21 = arith.addf %20, %19 : vector<8x128xf32>
    %22 = arith.divf %20, %21 : vector<8x128xf32>
    %23 = vector.extract_strided_slice %10 {offsets = [0, 256], sizes = [8, 128], strides = [1, 1]} : vector<8x512xf32> to vector<8x128xf32>
    %24 = math.tanh %23 : vector<8x128xf32>
    %25 = vector.extract_strided_slice %10 {offsets = [0, 384], sizes = [8, 128], strides = [1, 1]} : vector<8x512xf32> to vector<8x128xf32>
    %26 = arith.negf %25 : vector<8x128xf32>
    %27 = math.exp %26 : vector<8x128xf32>
    %cst_11 = arith.constant 1.000000e+00 : f32
    %28 = vector.broadcast %cst_11 : f32 to vector<8x128xf32>
    %29 = arith.addf %28, %27 : vector<8x128xf32>
    %30 = arith.divf %28, %29 : vector<8x128xf32>
    %31 = arith.mulf %22, %5 : vector<8x128xf32>
    %32 = arith.mulf %16, %24 : vector<8x128xf32>
    %33 = arith.addf %31, %32 : vector<8x128xf32>
    %34 = math.tanh %33 : vector<8x128xf32>
    %35 = arith.mulf %30, %34 : vector<8x128xf32>
    %c1_i32 = arith.constant 1 : i32
    %36 = arith.index_cast %c1_i32 : i32 to index
    %c0_12 = arith.constant 0 : index
    %c0_13 = arith.constant 0 : index
    %37 = vector.load %arg2[%36, %c0_12, %c0_13] : memref<8x8x512xf32, #tpu.memory_space<vmem>>, vector<1x8x512xf32>
    %38 = vector.shape_cast %37 : vector<1x8x512xf32> to vector<8x512xf32>
    %cst_14 = arith.constant dense<0.000000e+00> : vector<8x512xf32>
    %39 = tpu.matmul %35, %3, %cst_14 {dimension_numbers = #tpu.dot_dimension_numbers<[1], [0], [0], [1], [0, 0, 1, 1], [], []>} : vector<8x128xf32>, vector<128x512xf32>, vector<8x512xf32> -> vector<8x512xf32>
    %40 = arith.addf %38, %39 : vector<8x512xf32>
    %41 = vector.extract_strided_slice %40 {offsets = [0, 0], sizes = [8, 128], strides = [1, 1]} : vector<8x512xf32> to vector<8x128xf32>
    %42 = arith.negf %41 : vector<8x128xf32>
    %43 = math.exp %42 : vector<8x128xf32>
    %cst_15 = arith.constant 1.000000e+00 : f32
    %44 = vector.broadcast %cst_15 : f32 to vector<8x128xf32>
    %45 = arith.addf %44, %43 : vector<8x128xf32>
    %46 = arith.divf %44, %45 : vector<8x128xf32>
    %47 = vector.extract_strided_slice %40 {offsets = [0, 128], sizes = [8, 128], strides = [1, 1]} : vector<8x512xf32> to vector<8x128xf32>
    %48 = arith.negf %47 : vector<8x128xf32>
    %49 = math.exp %48 : vector<8x128xf32>
    %cst_16 = arith.constant 1.000000e+00 : f32
    %50 = vector.broadcast %cst_16 : f32 to vector<8x128xf32>
    %51 = arith.addf %50, %49 : vector<8x128xf32>
    %52 = arith.divf %50, %51 : vector<8x128xf32>
    %53 = vector.extract_strided_slice %40 {offsets = [0, 256], sizes = [8, 128], strides = [1, 1]} : vector<8x512xf32> to vector<8x128xf32>
    %54 = math.tanh %53 : vector<8x128xf32>
    %55 = vector.extract_strided_slice %40 {offsets = [0, 384], sizes = [8, 128], strides = [1, 1]} : vector<8x512xf32> to vector<8x128xf32>
    %56 = arith.negf %55 : vector<8x128xf32>
    %57 = math.exp %56 : vector<8x128xf32>
    %cst_17 = arith.constant 1.000000e+00 : f32
    %58 = vector.broadcast %cst_17 : f32 to vector<8x128xf32>
    %59 = arith.addf %58, %57 : vector<8x128xf32>
    %60 = arith.divf %58, %59 : vector<8x128xf32>
    %61 = arith.mulf %52, %33 : vector<8x128xf32>
    %62 = arith.mulf %46, %54 : vector<8x128xf32>
    %63 = arith.addf %61, %62 : vector<8x128xf32>
    %64 = math.tanh %63 : vector<8x128xf32>
    %65 = arith.mulf %60, %64 : vector<8x128xf32>
    %c2_i32 = arith.constant 2 : i32
    %66 = arith.index_cast %c2_i32 : i32 to index
    %c0_18 = arith.constant 0 : index
    %c0_19 = arith.constant 0 : index
    %67 = vector.load %arg2[%66, %c0_18, %c0_19] : memref<8x8x512xf32, #tpu.memory_space<vmem>>, vector<1x8x512xf32>
    %68 = vector.shape_cast %67 : vector<1x8x512xf32> to vector<8x512xf32>
    %cst_20 = arith.constant dense<0.000000e+00> : vector<8x512xf32>
    %69 = tpu.matmul %65, %3, %cst_20 {dimension_numbers = #tpu.dot_dimension_numbers<[1], [0], [0], [1], [0, 0, 1, 1], [], []>} : vector<8x128xf32>, vector<128x512xf32>, vector<8x512xf32> -> vector<8x512xf32>
    %70 = arith.addf %68, %69 : vector<8x512xf32>
    %71 = vector.extract_strided_slice %70 {offsets = [0, 0], sizes = [8, 128], strides = [1, 1]} : vector<8x512xf32> to vector<8x128xf32>
    %72 = arith.negf %71 : vector<8x128xf32>
    %73 = math.exp %72 : vector<8x128xf32>
    %cst_21 = arith.constant 1.000000e+00 : f32
    %74 = vector.broadcast %cst_21 : f32 to vector<8x128xf32>
    %75 = arith.addf %74, %73 : vector<8x128xf32>
    %76 = arith.divf %74, %75 : vector<8x128xf32>
    %77 = vector.extract_strided_slice %70 {offsets = [0, 128], sizes = [8, 128], strides = [1, 1]} : vector<8x512xf32> to vector<8x128xf32>
    %78 = arith.negf %77 : vector<8x128xf32>
    %79 = math.exp %78 : vector<8x128xf32>
    %cst_22 = arith.constant 1.000000e+00 : f32
    %80 = vector.broadcast %cst_22 : f32 to vector<8x128xf32>
    %81 = arith.addf %80, %79 : vector<8x128xf32>
    %82 = arith.divf %80, %81 : vector<8x128xf32>
    %83 = vector.extract_strided_slice %70 {offsets = [0, 256], sizes = [8, 128], strides = [1, 1]} : vector<8x512xf32> to vector<8x128xf32>
    %84 = math.tanh %83 : vector<8x128xf32>
    %85 = vector.extract_strided_slice %70 {offsets = [0, 384], sizes = [8, 128], strides = [1, 1]} : vector<8x512xf32> to vector<8x128xf32>
    %86 = arith.negf %85 : vector<8x128xf32>
    %87 = math.exp %86 : vector<8x128xf32>
    %cst_23 = arith.constant 1.000000e+00 : f32
    %88 = vector.broadcast %cst_23 : f32 to vector<8x128xf32>
    %89 = arith.addf %88, %87 : vector<8x128xf32>
    %90 = arith.divf %88, %89 : vector<8x128xf32>
    %91 = arith.mulf %82, %63 : vector<8x128xf32>
    %92 = arith.mulf %76, %84 : vector<8x128xf32>
    %93 = arith.addf %91, %92 : vector<8x128xf32>
    %94 = math.tanh %93 : vector<8x128xf32>
    %95 = arith.mulf %90, %94 : vector<8x128xf32>
    %c3_i32 = arith.constant 3 : i32
    %96 = arith.index_cast %c3_i32 : i32 to index
    %c0_24 = arith.constant 0 : index
    %c0_25 = arith.constant 0 : index
    %97 = vector.load %arg2[%96, %c0_24, %c0_25] : memref<8x8x512xf32, #tpu.memory_space<vmem>>, vector<1x8x512xf32>
    %98 = vector.shape_cast %97 : vector<1x8x512xf32> to vector<8x512xf32>
    %cst_26 = arith.constant dense<0.000000e+00> : vector<8x512xf32>
    %99 = tpu.matmul %95, %3, %cst_26 {dimension_numbers = #tpu.dot_dimension_numbers<[1], [0], [0], [1], [0, 0, 1, 1], [], []>} : vector<8x128xf32>, vector<128x512xf32>, vector<8x512xf32> -> vector<8x512xf32>
    %100 = arith.addf %98, %99 : vector<8x512xf32>
    %101 = vector.extract_strided_slice %100 {offsets = [0, 0], sizes = [8, 128], strides = [1, 1]} : vector<8x512xf32> to vector<8x128xf32>
    %102 = arith.negf %101 : vector<8x128xf32>
    %103 = math.exp %102 : vector<8x128xf32>
    %cst_27 = arith.constant 1.000000e+00 : f32
    %104 = vector.broadcast %cst_27 : f32 to vector<8x128xf32>
    %105 = arith.addf %104, %103 : vector<8x128xf32>
    %106 = arith.divf %104, %105 : vector<8x128xf32>
    %107 = vector.extract_strided_slice %100 {offsets = [0, 128], sizes = [8, 128], strides = [1, 1]} : vector<8x512xf32> to vector<8x128xf32>
    %108 = arith.negf %107 : vector<8x128xf32>
    %109 = math.exp %108 : vector<8x128xf32>
    %cst_28 = arith.constant 1.000000e+00 : f32
    %110 = vector.broadcast %cst_28 : f32 to vector<8x128xf32>
    %111 = arith.addf %110, %109 : vector<8x128xf32>
    %112 = arith.divf %110, %111 : vector<8x128xf32>
    %113 = vector.extract_strided_slice %100 {offsets = [0, 256], sizes = [8, 128], strides = [1, 1]} : vector<8x512xf32> to vector<8x128xf32>
    %114 = math.tanh %113 : vector<8x128xf32>
    %115 = vector.extract_strided_slice %100 {offsets = [0, 384], sizes = [8, 128], strides = [1, 1]} : vector<8x512xf32> to vector<8x128xf32>
    %116 = arith.negf %115 : vector<8x128xf32>
    %117 = math.exp %116 : vector<8x128xf32>
    %cst_29 = arith.constant 1.000000e+00 : f32
    %118 = vector.broadcast %cst_29 : f32 to vector<8x128xf32>
    %119 = arith.addf %118, %117 : vector<8x128xf32>
    %120 = arith.divf %118, %119 : vector<8x128xf32>
    %121 = arith.mulf %112, %93 : vector<8x128xf32>
    %122 = arith.mulf %106, %114 : vector<8x128xf32>
    %123 = arith.addf %121, %122 : vector<8x128xf32>
    %124 = math.tanh %123 : vector<8x128xf32>
    %125 = arith.mulf %120, %124 : vector<8x128xf32>
    %c4_i32 = arith.constant 4 : i32
    %126 = arith.index_cast %c4_i32 : i32 to index
    %c0_30 = arith.constant 0 : index
    %c0_31 = arith.constant 0 : index
    %127 = vector.load %arg2[%126, %c0_30, %c0_31] : memref<8x8x512xf32, #tpu.memory_space<vmem>>, vector<1x8x512xf32>
    %128 = vector.shape_cast %127 : vector<1x8x512xf32> to vector<8x512xf32>
    %cst_32 = arith.constant dense<0.000000e+00> : vector<8x512xf32>
    %129 = tpu.matmul %125, %3, %cst_32 {dimension_numbers = #tpu.dot_dimension_numbers<[1], [0], [0], [1], [0, 0, 1, 1], [], []>} : vector<8x128xf32>, vector<128x512xf32>, vector<8x512xf32> -> vector<8x512xf32>
    %130 = arith.addf %128, %129 : vector<8x512xf32>
    %131 = vector.extract_strided_slice %130 {offsets = [0, 0], sizes = [8, 128], strides = [1, 1]} : vector<8x512xf32> to vector<8x128xf32>
    %132 = arith.negf %131 : vector<8x128xf32>
    %133 = math.exp %132 : vector<8x128xf32>
    %cst_33 = arith.constant 1.000000e+00 : f32
    %134 = vector.broadcast %cst_33 : f32 to vector<8x128xf32>
    %135 = arith.addf %134, %133 : vector<8x128xf32>
    %136 = arith.divf %134, %135 : vector<8x128xf32>
    %137 = vector.extract_strided_slice %130 {offsets = [0, 128], sizes = [8, 128], strides = [1, 1]} : vector<8x512xf32> to vector<8x128xf32>
    %138 = arith.negf %137 : vector<8x128xf32>
    %139 = math.exp %138 : vector<8x128xf32>
    %cst_34 = arith.constant 1.000000e+00 : f32
    %140 = vector.broadcast %cst_34 : f32 to vector<8x128xf32>
    %141 = arith.addf %140, %139 : vector<8x128xf32>
    %142 = arith.divf %140, %141 : vector<8x128xf32>
    %143 = vector.extract_strided_slice %130 {offsets = [0, 256], sizes = [8, 128], strides = [1, 1]} : vector<8x512xf32> to vector<8x128xf32>
    %144 = math.tanh %143 : vector<8x128xf32>
    %145 = vector.extract_strided_slice %130 {offsets = [0, 384], sizes = [8, 128], strides = [1, 1]} : vector<8x512xf32> to vector<8x128xf32>
    %146 = arith.negf %145 : vector<8x128xf32>
    %147 = math.exp %146 : vector<8x128xf32>
    %cst_35 = arith.constant 1.000000e+00 : f32
    %148 = vector.broadcast %cst_35 : f32 to vector<8x128xf32>
    %149 = arith.addf %148, %147 : vector<8x128xf32>
    %150 = arith.divf %148, %149 : vector<8x128xf32>
    %151 = arith.mulf %142, %123 : vector<8x128xf32>
    %152 = arith.mulf %136, %144 : vector<8x128xf32>
    %153 = arith.addf %151, %152 : vector<8x128xf32>
    %154 = math.tanh %153 : vector<8x128xf32>
    %155 = arith.mulf %150, %154 : vector<8x128xf32>
    %c5_i32 = arith.constant 5 : i32
    %156 = arith.index_cast %c5_i32 : i32 to index
    %c0_36 = arith.constant 0 : index
    %c0_37 = arith.constant 0 : index
    %157 = vector.load %arg2[%156, %c0_36, %c0_37] : memref<8x8x512xf32, #tpu.memory_space<vmem>>, vector<1x8x512xf32>
    %158 = vector.shape_cast %157 : vector<1x8x512xf32> to vector<8x512xf32>
    %cst_38 = arith.constant dense<0.000000e+00> : vector<8x512xf32>
    %159 = tpu.matmul %155, %3, %cst_38 {dimension_numbers = #tpu.dot_dimension_numbers<[1], [0], [0], [1], [0, 0, 1, 1], [], []>} : vector<8x128xf32>, vector<128x512xf32>, vector<8x512xf32> -> vector<8x512xf32>
    %160 = arith.addf %158, %159 : vector<8x512xf32>
    %161 = vector.extract_strided_slice %160 {offsets = [0, 0], sizes = [8, 128], strides = [1, 1]} : vector<8x512xf32> to vector<8x128xf32>
    %162 = arith.negf %161 : vector<8x128xf32>
    %163 = math.exp %162 : vector<8x128xf32>
    %cst_39 = arith.constant 1.000000e+00 : f32
    %164 = vector.broadcast %cst_39 : f32 to vector<8x128xf32>
    %165 = arith.addf %164, %163 : vector<8x128xf32>
    %166 = arith.divf %164, %165 : vector<8x128xf32>
    %167 = vector.extract_strided_slice %160 {offsets = [0, 128], sizes = [8, 128], strides = [1, 1]} : vector<8x512xf32> to vector<8x128xf32>
    %168 = arith.negf %167 : vector<8x128xf32>
    %169 = math.exp %168 : vector<8x128xf32>
    %cst_40 = arith.constant 1.000000e+00 : f32
    %170 = vector.broadcast %cst_40 : f32 to vector<8x128xf32>
    %171 = arith.addf %170, %169 : vector<8x128xf32>
    %172 = arith.divf %170, %171 : vector<8x128xf32>
    %173 = vector.extract_strided_slice %160 {offsets = [0, 256], sizes = [8, 128], strides = [1, 1]} : vector<8x512xf32> to vector<8x128xf32>
    %174 = math.tanh %173 : vector<8x128xf32>
    %175 = vector.extract_strided_slice %160 {offsets = [0, 384], sizes = [8, 128], strides = [1, 1]} : vector<8x512xf32> to vector<8x128xf32>
    %176 = arith.negf %175 : vector<8x128xf32>
    %177 = math.exp %176 : vector<8x128xf32>
    %cst_41 = arith.constant 1.000000e+00 : f32
    %178 = vector.broadcast %cst_41 : f32 to vector<8x128xf32>
    %179 = arith.addf %178, %177 : vector<8x128xf32>
    %180 = arith.divf %178, %179 : vector<8x128xf32>
    %181 = arith.mulf %172, %153 : vector<8x128xf32>
    %182 = arith.mulf %166, %174 : vector<8x128xf32>
    %183 = arith.addf %181, %182 : vector<8x128xf32>
    %184 = math.tanh %183 : vector<8x128xf32>
    %185 = arith.mulf %180, %184 : vector<8x128xf32>
    %c6_i32 = arith.constant 6 : i32
    %186 = arith.index_cast %c6_i32 : i32 to index
    %c0_42 = arith.constant 0 : index
    %c0_43 = arith.constant 0 : index
    %187 = vector.load %arg2[%186, %c0_42, %c0_43] : memref<8x8x512xf32, #tpu.memory_space<vmem>>, vector<1x8x512xf32>
    %188 = vector.shape_cast %187 : vector<1x8x512xf32> to vector<8x512xf32>
    %cst_44 = arith.constant dense<0.000000e+00> : vector<8x512xf32>
    %189 = tpu.matmul %185, %3, %cst_44 {dimension_numbers = #tpu.dot_dimension_numbers<[1], [0], [0], [1], [0, 0, 1, 1], [], []>} : vector<8x128xf32>, vector<128x512xf32>, vector<8x512xf32> -> vector<8x512xf32>
    %190 = arith.addf %188, %189 : vector<8x512xf32>
    %191 = vector.extract_strided_slice %190 {offsets = [0, 0], sizes = [8, 128], strides = [1, 1]} : vector<8x512xf32> to vector<8x128xf32>
    %192 = arith.negf %191 : vector<8x128xf32>
    %193 = math.exp %192 : vector<8x128xf32>
    %cst_45 = arith.constant 1.000000e+00 : f32
    %194 = vector.broadcast %cst_45 : f32 to vector<8x128xf32>
    %195 = arith.addf %194, %193 : vector<8x128xf32>
    %196 = arith.divf %194, %195 : vector<8x128xf32>
    %197 = vector.extract_strided_slice %190 {offsets = [0, 128], sizes = [8, 128], strides = [1, 1]} : vector<8x512xf32> to vector<8x128xf32>
    %198 = arith.negf %197 : vector<8x128xf32>
    %199 = math.exp %198 : vector<8x128xf32>
    %cst_46 = arith.constant 1.000000e+00 : f32
    %200 = vector.broadcast %cst_46 : f32 to vector<8x128xf32>
    %201 = arith.addf %200, %199 : vector<8x128xf32>
    %202 = arith.divf %200, %201 : vector<8x128xf32>
    %203 = vector.extract_strided_slice %190 {offsets = [0, 256], sizes = [8, 128], strides = [1, 1]} : vector<8x512xf32> to vector<8x128xf32>
    %204 = math.tanh %203 : vector<8x128xf32>
    %205 = vector.extract_strided_slice %190 {offsets = [0, 384], sizes = [8, 128], strides = [1, 1]} : vector<8x512xf32> to vector<8x128xf32>
    %206 = arith.negf %205 : vector<8x128xf32>
    %207 = math.exp %206 : vector<8x128xf32>
    %cst_47 = arith.constant 1.000000e+00 : f32
    %208 = vector.broadcast %cst_47 : f32 to vector<8x128xf32>
    %209 = arith.addf %208, %207 : vector<8x128xf32>
    %210 = arith.divf %208, %209 : vector<8x128xf32>
    %211 = arith.mulf %202, %183 : vector<8x128xf32>
    %212 = arith.mulf %196, %204 : vector<8x128xf32>
    %213 = arith.addf %211, %212 : vector<8x128xf32>
    %214 = math.tanh %213 : vector<8x128xf32>
    %215 = arith.mulf %210, %214 : vector<8x128xf32>
    %c7_i32 = arith.constant 7 : i32
    %216 = arith.index_cast %c7_i32 : i32 to index
    %c0_48 = arith.constant 0 : index
    %c0_49 = arith.constant 0 : index
    %217 = vector.load %arg2[%216, %c0_48, %c0_49] : memref<8x8x512xf32, #tpu.memory_space<vmem>>, vector<1x8x512xf32>
    %218 = vector.shape_cast %217 : vector<1x8x512xf32> to vector<8x512xf32>
    %cst_50 = arith.constant dense<0.000000e+00> : vector<8x512xf32>
    %219 = tpu.matmul %215, %3, %cst_50 {dimension_numbers = #tpu.dot_dimension_numbers<[1], [0], [0], [1], [0, 0, 1, 1], [], []>} : vector<8x128xf32>, vector<128x512xf32>, vector<8x512xf32> -> vector<8x512xf32>
    %220 = arith.addf %218, %219 : vector<8x512xf32>
    %221 = vector.extract_strided_slice %220 {offsets = [0, 0], sizes = [8, 128], strides = [1, 1]} : vector<8x512xf32> to vector<8x128xf32>
    %222 = arith.negf %221 : vector<8x128xf32>
    %223 = math.exp %222 : vector<8x128xf32>
    %cst_51 = arith.constant 1.000000e+00 : f32
    %224 = vector.broadcast %cst_51 : f32 to vector<8x128xf32>
    %225 = arith.addf %224, %223 : vector<8x128xf32>
    %226 = arith.divf %224, %225 : vector<8x128xf32>
    %227 = vector.extract_strided_slice %220 {offsets = [0, 128], sizes = [8, 128], strides = [1, 1]} : vector<8x512xf32> to vector<8x128xf32>
    %228 = arith.negf %227 : vector<8x128xf32>
    %229 = math.exp %228 : vector<8x128xf32>
    %cst_52 = arith.constant 1.000000e+00 : f32
    %230 = vector.broadcast %cst_52 : f32 to vector<8x128xf32>
    %231 = arith.addf %230, %229 : vector<8x128xf32>
    %232 = arith.divf %230, %231 : vector<8x128xf32>
    %233 = vector.extract_strided_slice %220 {offsets = [0, 256], sizes = [8, 128], strides = [1, 1]} : vector<8x512xf32> to vector<8x128xf32>
    %234 = math.tanh %233 : vector<8x128xf32>
    %235 = vector.extract_strided_slice %220 {offsets = [0, 384], sizes = [8, 128], strides = [1, 1]} : vector<8x512xf32> to vector<8x128xf32>
    %236 = arith.negf %235 : vector<8x128xf32>
    %237 = math.exp %236 : vector<8x128xf32>
    %cst_53 = arith.constant 1.000000e+00 : f32
    %238 = vector.broadcast %cst_53 : f32 to vector<8x128xf32>
    %239 = arith.addf %238, %237 : vector<8x128xf32>
    %240 = arith.divf %238, %239 : vector<8x128xf32>
    %241 = arith.mulf %232, %213 : vector<8x128xf32>
    %242 = arith.mulf %226, %234 : vector<8x128xf32>
    %243 = arith.addf %241, %242 : vector<8x128xf32>
    %244 = math.tanh %243 : vector<8x128xf32>
    %245 = arith.mulf %240, %244 : vector<8x128xf32>
    %c8_i32 = arith.constant 8 : i32
    %c0_54 = arith.constant 0 : index
    %c0_55 = arith.constant 0 : index
    %246 = vector.load %arg6[%c0_54, %c0_55] : memref<8x128xf32, #tpu.memory_space<vmem>>, vector<8x128xf32>
    tpu.vector_store %arg6[%c0_54, %c0_55], %245 {strides = array<i32>} : memref<8x128xf32, #tpu.memory_space<vmem>>, vector<8x128xf32>,
    %c0_56 = arith.constant 0 : index
    %c0_57 = arith.constant 0 : index
    %247 = vector.load %arg7[%c0_56, %c0_57] : memref<8x128xf32, #tpu.memory_space<vmem>>, vector<8x128xf32>
    tpu.vector_store %arg7[%c0_56, %c0_57], %243 {strides = array<i32>} : memref<8x128xf32, #tpu.memory_space<vmem>>, vector<8x128xf32>,
    %c0_i32_58 = arith.constant 0 : i32
    %248 = arith.cmpi eq, %arg1, %c0_i32_58 : i32
    %249 = arith.extui %248 : i1 to i32
    %c0_i32_59 = arith.constant 0 : i32
    %250 = arith.cmpi ne, %249, %c0_i32_59 : i32
    scf.if %250 {
      %c0_60 = arith.constant 0 : index
      %c0_61 = arith.constant 0 : index
      %c0_62 = arith.constant 0 : index
      %251 = vector.load %arg4[%c0_60, %c0_61, %c0_62] : memref<1x8x128xf32, #tpu.memory_space<vmem>>, vector<1x8x128xf32>
      %252 = vector.shape_cast %251 : vector<1x8x128xf32> to vector<8x128xf32>
      %253 = vector.shape_cast %245 : vector<8x128xf32> to vector<1x8x128xf32>
      tpu.vector_store %arg4[%c0_60, %c0_61, %c0_62], %253 {strides = array<i32>} : memref<1x8x128xf32, #tpu.memory_space<vmem>>, vector<1x8x128xf32>,
      %c0_63 = arith.constant 0 : index
      %c0_64 = arith.constant 0 : index
      %c0_65 = arith.constant 0 : index
      %254 = vector.load %arg5[%c0_63, %c0_64, %c0_65] : memref<1x8x128xf32, #tpu.memory_space<vmem>>, vector<1x8x128xf32>
      %255 = vector.shape_cast %254 : vector<1x8x128xf32> to vector<8x128xf32>
      %256 = vector.shape_cast %243 : vector<8x128xf32> to vector<1x8x128xf32>
      tpu.vector_store %arg5[%c0_63, %c0_64, %c0_65], %256 {strides = array<i32>} : memref<1x8x128xf32, #tpu.memory_space<vmem>>, vector<1x8x128xf32>,
    } else {
    }
    return
  }
  func.func @transform_0(%arg0: i32, %arg1: i32) -> (i32, i32, i32) {
    %c0_i32 = arith.constant 0 : i32
    %c0_i32_0 = arith.constant 0 : i32
    return %arg1, %arg0, %c0_i32 : i32, i32, i32
  }
  func.func @transform_1(%arg0: i32, %arg1: i32) -> (i32, i32) {
    %c0_i32 = arith.constant 0 : i32
    %c0_i32_0 = arith.constant 0 : i32
    %c0_i32_1 = arith.constant 0 : i32
    return %c0_i32, %c0_i32_0 : i32, i32
  }
  func.func @transform_2(%arg0: i32, %arg1: i32) -> (i32, i32, i32) {
    %c0_i32 = arith.constant 0 : i32
    %c0_i32_0 = arith.constant 0 : i32
    %c0_i32_1 = arith.constant 0 : i32
    return %c0_i32, %arg0, %c0_i32_0 : i32, i32, i32
  }
  func.func @transform_3(%arg0: i32, %arg1: i32) -> (i32, i32, i32) {
    %c0_i32 = arith.constant 0 : i32
    %c0_i32_0 = arith.constant 0 : i32
    %c0_i32_1 = arith.constant 0 : i32
    return %c0_i32, %arg0, %c0_i32_0 : i32, i32, i32
  }
}

</mosaic_0001>

<llo_original>
// kernel: tpu_custom_call.1
$region0: #{tpu_custom_call.1}
  #allocation0 [shape = 'u32[]', space=smem, size = 0x4, offset = 0x4, fixed_abs, tag = 'smem constant byte address 0x4 - core index']
  #allocation1 [shape = 'u32[144,128]{1,0:T(1,128)}', space=vmem, size = 0x12000, scoped, tag = 'internal scratch']
  #allocation2 [shape = 'f32[8,128]{1,0:T(8,128)}', space=vmem, size = 0x1000, scoped, tag = 'scratch operand']
  #allocation3 [shape = 'f32[8,128]{1,0:T(8,128)}', space=vmem, size = 0x1000, scoped, tag = 'scratch operand']
  %s0 = inlined_call_operand.hbm [shape: f32[8,8,512], index: 0, kind: input, shape index: {}]
  %s1 = inlined_call_operand.hbm [shape: f32[128,512], index: 1, kind: input, shape index: {}]
  %s2 = inlined_call_operand.hbm [shape: f32[1,8,128], index: 2, kind: output, shape index: {0}]
  %s3 = inlined_call_operand.hbm [shape: f32[1,8,128], index: 3, kind: output, shape index: {1}]
  %4 = xla_tuple %s2, %s3
  %s5 = sld [smem:[#allocation0]]
  $region42: #{tpu_custom_call.1} parent=0
    _
  %s7 = ssub.s32 1, %s5
  %s8 = scalar_select 0, %s7, %s5
  $region1: #{tpu_custom_call.1} parent=0
    #allocation4 [shape = 'u8[131072]{0}', space=vmem, size = 0x20000, scoped, tag = 'input window, operand 0, single buffered']
    #allocation5 [shape = 's32[1]{0}', space=sflag, size = 0x4, scoped, tag = 'scoped memory for tpu_custom_call.1']
    #allocation6 [shape = 's32[1]{0}', space=sflag, size = 0x4, scoped, tag = 'scoped memory for tpu_custom_call.1']
    #allocation7 [shape = 'u8[262144]{0}', space=vmem, size = 0x40000, scoped, tag = 'input window, operand 1, single buffered']
    #allocation8 [shape = 's32[1]{0}', space=sflag, size = 0x4, scoped, tag = 'scoped memory for tpu_custom_call.1']
    #allocation9 [shape = 'u8[4096]{0}', space=vmem, size = 0x1000, scoped, tag = 'output window, operand 0, single buffered']
    #allocation10 [shape = 'u8[4096]{0}', space=vmem, size = 0x1000, scoped, tag = 'output window, operand 1, single buffered']
    #allocation11 [shape = 's32[1]{0}', space=sflag, size = 0x4, scoped, tag = 'scoped memory for tpu_custom_call.1']
    %9 = vsyncpa [#allocation5], 0
    %10 = vsyncpa [#allocation8], 0
    %11 = vsyncpa [#allocation6], 0
    %12 = vsyncpa [#allocation11], 0
    // Predicated region
    $region2: #{tpu_custom_call.1} parent=1 // pred_check
      _
    $region3: #{tpu_custom_call.1} parent=1 // pred_check_branch
      %14 = sbr.rel (0) target = $region5
    $region4: #{tpu_custom_call.1} parent=1 // pred_region
      %s16 = ssub.s32 4096, 4096
      %17 = vsyncadd [#allocation5], %s16
      %s18 = sshll.u32 [#allocation4], 4
      %s19 = int_to_ptr.vmem [resolvable:$true] %s18
      %24 = dma.hbm_to_vmem [thread:$0]  %s0, 4096, %s19, [#allocation5], 512, 512, 32
    $region5: #{tpu_custom_call.1} parent=1 // pred_fallthru
      _
    // Predicated region
    $region6: #{tpu_custom_call.1} parent=1 // pred_check
      _
    $region7: #{tpu_custom_call.1} parent=1 // pred_check_branch
      %26 = sbr.rel (0) target = $region9
    $region8: #{tpu_custom_call.1} parent=1 // pred_region
      %s28 = ssub.s32 8192, 8192
      %29 = vsyncadd [#allocation8], %s28
      %s30 = sshll.u32 [#allocation7], 4
      %s31 = int_to_ptr.vmem [resolvable:$true] %s30
      %36 = dma.hbm_to_vmem [thread:$0]  %s1, 8192, %s31, [#allocation8], 512, 512, 32
    $region9: #{tpu_custom_call.1} parent=1 // pred_fallthru
      _
    // Predicated region
    $region10: #{tpu_custom_call.1} parent=1 // pred_check
      _
    $region11: #{tpu_custom_call.1} parent=1 // pred_check_branch
      %38 = sbr.rel (0) target = $region13
    $region12: #{tpu_custom_call.1} parent=1 // pred_region
      %39 = dma.done [#allocation5], 4096
    $region13: #{tpu_custom_call.1} parent=1 // pred_fallthru
      _
    // Predicated region
    $region14: #{tpu_custom_call.1} parent=1 // pred_check
      _
    $region15: #{tpu_custom_call.1} parent=1 // pred_check_branch
      %41 = sbr.rel (0) target = $region17
    $region16: #{tpu_custom_call.1} parent=1 // pred_region
      %42 = dma.done [#allocation8], 8192
    $region17: #{tpu_custom_call.1} parent=1 // pred_fallthru
      _
    %p43 = scmp.eq.s32.totalorder 0, 0
    // Predicated region
    $region18: #{tpu_custom_call.1} parent=1 // pred_check
      %p44 = pneg %p43
    $region19: #{tpu_custom_call.1} parent=1 // pred_check_branch
      %46 = sbr.rel (%p44) target = $region21
    $region20: #{tpu_custom_call.1} parent=1 // pred_region
      %47 = vst [vmem:[#allocation2] sm:$0xff] 0.0
      %48 = vst [vmem:[#allocation3] sm:$0xff] 0.0
    $region21: #{tpu_custom_call.1} parent=1 // pred_fallthru
      _
    %v49 = vld [vmem:[#allocation7] sm:$0xff]
    %v50 = vld [vmem:[#allocation7 + $0x8] sm:$0xff]
    %v51 = vld [vmem:[#allocation7 + $0x10] sm:$0xff]
    %v52 = vld [vmem:[#allocation7 + $0x18] sm:$0xff]
    %v53 = vld [vmem:[#allocation7 + $0x20] sm:$0xff]
    %v54 = vld [vmem:[#allocation7 + $0x28] sm:$0xff]
    %v55 = vld [vmem:[#allocation7 + $0x30] sm:$0xff]
    %v56 = vld [vmem:[#allocation7 + $0x38] sm:$0xff]
    %v57 = vld [vmem:[#allocation7 + $0x40] sm:$0xff]
    %v58 = vld [vmem:[#allocation7 + $0x48] sm:$0xff]
    %v59 = vld [vmem:[#allocation7 + $0x50] sm:$0xff]
    %v60 = vld [vmem:[#allocation7 + $0x58] sm:$0xff]
    %v61 = vld [vmem:[#allocation7 + $0x60] sm:$0xff]
    %v62 = vld [vmem:[#allocation7 + $0x68] sm:$0xff]
    %v63 = vld [vmem:[#allocation7 + $0x70] sm:$0xff]
    %v64 = vld [vmem:[#allocation7 + $0x78] sm:$0xff]
    %v65 = vld [vmem:[#allocation7 + $0x80] sm:$0xff]
    %v66 = vld [vmem:[#allocation7 + $0x88] sm:$0xff]
    %v67 = vld [vmem:[#allocation7 + $0x90] sm:$0xff]
    %v68 = vld [vmem:[#allocation7 + $0x98] sm:$0xff]
    %v69 = vld [vmem:[#allocation7 + $0xa0] sm:$0xff]
    %v70 = vld [vmem:[#allocation7 + $0xa8] sm:$0xff]
    %v71 = vld [vmem:[#allocation7 + $0xb0] sm:$0xff]
    %v72 = vld [vmem:[#allocation7 + $0xb8] sm:$0xff]
    %v73 = vld [vmem:[#allocation7 + $0xc0] sm:$0xff]
    %v74 = vld [vmem:[#allocation7 + $0xc8] sm:$0xff]
    %v75 = vld [vmem:[#allocation7 + $0xd0] sm:$0xff]
    %v76 = vld [vmem:[#allocation7 + $0xd8] sm:$0xff]
    %v77 = vld [vmem:[#allocation7 + $0xe0] sm:$0xff]
    %v78 = vld [vmem:[#allocation7 + $0xe8] sm:$0xff]
    %v79 = vld [vmem:[#allocation7 + $0xf0] sm:$0xff]
    %v80 = vld [vmem:[#allocation7 + $0xf8] sm:$0xff]
    %v81 = vld [vmem:[#allocation7 + $0x100] sm:$0xff]
    %v82 = vld [vmem:[#allocation7 + $0x108] sm:$0xff]
    %v83 = vld [vmem:[#allocation7 + $0x110] sm:$0xff]
    %v84 = vld [vmem:[#allocation7 + $0x118] sm:$0xff]
    %v85 = vld [vmem:[#allocation7 + $0x120] sm:$0xff]
    %v86 = vld [vmem:[#allocation7 + $0x128] sm:$0xff]
    %v87 = vld [vmem:[#allocation7 + $0x130] sm:$0xff]
    %v88 = vld [vmem:[#allocation7 + $0x138] sm:$0xff]
    %v89 = vld [vmem:[#allocation7 + $0x140] sm:$0xff]
    %v90 = vld [vmem:[#allocation7 + $0x148] sm:$0xff]
    %v91 = vld [vmem:[#allocation7 + $0x150] sm:$0xff]
    %v92 = vld [vmem:[#allocation7 + $0x158] sm:$0xff]
    %v93 = vld [vmem:[#allocation7 + $0x160] sm:$0xff]
    %v94 = vld [vmem:[#allocation7 + $0x168] sm:$0xff]
    %v95 = vld [vmem:[#allocation7 + $0x170] sm:$0xff]
    %v96 = vld [vmem:[#allocation7 + $0x178] sm:$0xff]
    %v97 = vld [vmem:[#allocation7 + $0x180] sm:$0xff]
    %v98 = vld [vmem:[#allocation7 + $0x188] sm:$0xff]
    %v99 = vld [vmem:[#allocation7 + $0x190] sm:$0xff]
    %v100 = vld [vmem:[#allocation7 + $0x198] sm:$0xff]
    %v101 = vld [vmem:[#allocation7 + $0x1a0] sm:$0xff]
    %v102 = vld [vmem:[#allocation7 + $0x1a8] sm:$0xff]
    %v103 = vld [vmem:[#allocation7 + $0x1b0] sm:$0xff]
    %v104 = vld [vmem:[#allocation7 + $0x1b8] sm:$0xff]
    %v105 = vld [vmem:[#allocation7 + $0x1c0] sm:$0xff]
    %v106 = vld [vmem:[#allocation7 + $0x1c8] sm:$0xff]
    %v107 = vld [vmem:[#allocation7 + $0x1d0] sm:$0xff]
    %v108 = vld [vmem:[#allocation7 + $0x1d8] sm:$0xff]
    %v109 = vld [vmem:[#allocation7 + $0x1e0] sm:$0xff]
    %v110 = vld [vmem:[#allocation7 + $0x1e8] sm:$0xff]
    %v111 = vld [vmem:[#allocation7 + $0x1f0] sm:$0xff]
    %v112 = vld [vmem:[#allocation7 + $0x1f8] sm:$0xff]
    %v113 = vld [vmem:[#allocation2] sm:$0xff]
    %v114 = vld [vmem:[#allocation3] sm:$0xff]
    %v115 = vld [vmem:[#allocation4] sm:$0xff]
    %v116 = vld [vmem:[#allocation4 + $0x8] sm:$0xff]
    %v117 = vld [vmem:[#allocation4 + $0x10] sm:$0xff]
    %v118 = vld [vmem:[#allocation4 + $0x18] sm:$0xff]
    %119 = vmatprep.subr.mxu0 %v50
    %120 = vmatpush1.msra.mxu0 %v49
    %121 = vmatprep.subr.mxu0 %v54
    %122 = vmatpush1.msra.mxu0 %v53
    %123 = vmatprep.subr.mxu0 %v58
    %124 = vmatpush1.msra.mxu0 %v57
    %125 = vmatprep.subr.mxu0 %v62
    %126 = vmatpush1.msra.mxu0 %v61
    %127 = vmatprep.subr.mxu0 %v66
    %128 = vmatpush1.msra.mxu0 %v65
    %129 = vmatprep.subr.mxu0 %v70
    %130 = vmatpush1.msra.mxu0 %v69
    %131 = vmatprep.subr.mxu0 %v74
    %132 = vmatpush1.msra.mxu0 %v73
    %133 = vmatprep.subr.mxu0 %v78
    %134 = vmatpush1.msra.mxu0 %v77
    %135 = vmatprep.subr.mxu0 %v82
    %136 = vmatpush1.msra.mxu0 %v81
    %137 = vmatprep.subr.mxu0 %v86
    %138 = vmatpush1.msra.mxu0 %v85
    %139 = vmatprep.subr.mxu0 %v90
    %140 = vmatpush1.msra.mxu0 %v89
    %141 = vmatprep.subr.mxu0 %v94
    %142 = vmatpush1.msra.mxu0 %v93
    %143 = vmatprep.subr.mxu0 %v98
    %144 = vmatpush1.msra.mxu0 %v97
    %145 = vmatprep.subr.mxu0 %v102
    %146 = vmatpush1.msra.mxu0 %v101
    %147 = vmatprep.subr.mxu0 %v106
    %148 = vmatpush1.msra.mxu0 %v105
    %149 = vmatprep.subr.mxu0 %v110
    %150 = vmatpush1.msra.mxu0 %v109
    %151 = vmatprep.subr.mxu0 0.0
    %152 = vmatpush1.msra.mxu0 0.0
    %153 = vmatprep.subr.mxu0 0.0
    %154 = vmatpush1.msra.mxu0 0.0
    %155 = vmatprep.subr.mxu0 0.0
    %156 = vmatpush1.msra.mxu0 0.0
    %157 = vmatprep.subr.mxu0 0.0
    %158 = vmatpush1.msra.mxu0 0.0
    %159 = vmatprep.subr.mxu0 0.0
    %160 = vmatpush1.msra.mxu0 0.0
    %161 = vmatprep.subr.mxu0 0.0
    %162 = vmatpush1.msra.mxu0 0.0
    %163 = vmatprep.subr.mxu0 0.0
    %164 = vmatpush1.msra.mxu0 0.0
    %165 = vmatprep.subr.mxu0 0.0
    %166 = vmatpush1.msra.mxu0 0.0
    %167 = vmatprep.subr.mxu0 0.0
    %168 = vmatpush1.msra.mxu0 0.0
    %169 = vmatprep.subr.mxu0 0.0
    %170 = vmatpush1.msra.mxu0 0.0
    %171 = vmatprep.subr.mxu0 0.0
    %172 = vmatpush1.msra.mxu0 0.0
    %173 = vmatprep.subr.mxu0 0.0
    %174 = vmatpush1.msra.mxu0 0.0
    %175 = vmatprep.subr.mxu0 0.0
    %176 = vmatpush1.msra.mxu0 0.0
    %177 = vmatprep.subr.mxu0 0.0
    %178 = vmatpush1.msra.mxu0 0.0
    %179 = vmatprep.subr.mxu0 0.0
    %180 = vmatpush1.msra.mxu0 0.0
    %181 = vmatprep.subr.mxu0 0.0
    %182 = vmatpush1.msra.mxu0 0.0
    %183 = vmatprep.mubr.f32.mxu0 0.0
    %184 = vmatmul.mubr.f32.gmra.mrb[0].mxu0 %v113
    %v185 = vpop.f32.mrb[0].mxu0
    %v186 = vadd.f32 0.0, %v185
    %v187 = vpop.f32.mrb[0].mxu0
    %v188 = vadd.f32 0.0, %v187
    %189 = vdwg.mxu0
    %190 = vmatprep.subr.mxu0 %v52
    %191 = vmatpush1.msra.mxu0 %v51
    %192 = vmatprep.subr.mxu0 %v56
    %193 = vmatpush1.msra.mxu0 %v55
    %194 = vmatprep.subr.mxu0 %v60
    %195 = vmatpush1.msra.mxu0 %v59
    %196 = vmatprep.subr.mxu0 %v64
    %197 = vmatpush1.msra.mxu0 %v63
    %198 = vmatprep.subr.mxu0 %v68
    %199 = vmatpush1.msra.mxu0 %v67
    %200 = vmatprep.subr.mxu0 %v72
    %201 = vmatpush1.msra.mxu0 %v71
    %202 = vmatprep.subr.mxu0 %v76
    %203 = vmatpush1.msra.mxu0 %v75
    %204 = vmatprep.subr.mxu0 %v80
    %205 = vmatpush1.msra.mxu0 %v79
    %206 = vmatprep.subr.mxu0 %v84
    %207 = vmatpush1.msra.mxu0 %v83
    %208 = vmatprep.subr.mxu0 %v88
    %209 = vmatpush1.msra.mxu0 %v87
    %210 = vmatprep.subr.mxu0 %v92
    %211 = vmatpush1.msra.mxu0 %v91
    %212 = vmatprep.subr.mxu0 %v96
    %213 = vmatpush1.msra.mxu0 %v95
    %214 = vmatprep.subr.mxu0 %v100
    %215 = vmatpush1.msra.mxu0 %v99
    %216 = vmatprep.subr.mxu0 %v104
    %217 = vmatpush1.msra.mxu0 %v103
    %218 = vmatprep.subr.mxu0 %v108
    %219 = vmatpush1.msra.mxu0 %v107
    %220 = vmatprep.subr.mxu0 %v112
    %221 = vmatpush1.msra.mxu0 %v111
    %222 = vmatprep.subr.mxu0 0.0
    %223 = vmatpush1.msra.mxu0 0.0
    %224 = vmatprep.subr.mxu0 0.0
    %225 = vmatpush1.msra.mxu0 0.0
    %226 = vmatprep.subr.mxu0 0.0
    %227 = vmatpush1.msra.mxu0 0.0
    %228 = vmatprep.subr.mxu0 0.0
    %229 = vmatpush1.msra.mxu0 0.0
    %230 = vmatprep.subr.mxu0 0.0
    %231 = vmatpush1.msra.mxu0 0.0
    %232 = vmatprep.subr.mxu0 0.0
    %233 = vmatpush1.msra.mxu0 0.0
    %234 = vmatprep.subr.mxu0 0.0
    %235 = vmatpush1.msra.mxu0 0.0
    %236 = vmatprep.subr.mxu0 0.0
    %237 = vmatpush1.msra.mxu0 0.0
    %238 = vmatprep.subr.mxu0 0.0
    %239 = vmatpush1.msra.mxu0 0.0
    %240 = vmatprep.subr.mxu0 0.0
    %241 = vmatpush1.msra.mxu0 0.0
    %242 = vmatprep.subr.mxu0 0.0
    %243 = vmatpush1.msra.mxu0 0.0
    %244 = vmatprep.subr.mxu0 0.0
    %245 = vmatpush1.msra.mxu0 0.0
    %246 = vmatprep.subr.mxu0 0.0
    %247 = vmatpush1.msra.mxu0 0.0
    %248 = vmatprep.subr.mxu0 0.0
    %249 = vmatpush1.msra.mxu0 0.0
    %250 = vmatprep.subr.mxu0 0.0
    %251 = vmatpush1.msra.mxu0 0.0
    %252 = vmatprep.subr.mxu0 0.0
    %253 = vmatpush1.msra.mxu0 0.0
    %254 = vmatprep.mubr.f32.mxu0 0.0
    %255 = vmatmul.mubr.f32.gmra.mrb[0].mxu0 %v113
    %v256 = vpop.f32.mrb[0].mxu0
    %v257 = vadd.f32 0.0, %v256
    %v258 = vpop.f32.mrb[0].mxu0
    %v259 = vadd.f32 0.0, %v258
    %260 = vdwg.mxu0
    %v261 = vadd.f32 %v115, %v186
    %v262 = vadd.f32 %v116, %v188
    %v263 = vadd.f32 %v117, %v257
    %v264 = vadd.f32 %v118, %v259
    %v265 = vxor.u32 %v261, 2147483648
    %v266 = vmul.f32 %v265, 1.442695
    %v267 = vpow.pop %v266
    %v268 = vadd.f32 %v267, 1.0
    %v269 = vrcp.pop %v268
    %v270 = vmul.f32 1.0, %v269
    %v271 = vxor.u32 %v262, 2147483648
    %v272 = vmul.f32 %v271, 1.442695
    %v273 = vpow.pop %v272
    %v274 = vadd.f32 %v273, 1.0
    %v275 = vrcp.pop %v274
    %v276 = vmul.f32 1.0, %v275
    %v277 = vtanh.pop %v263
    %v278 = vxor.u32 %v264, 2147483648
    %v279 = vmul.f32 %v278, 1.442695
    %v280 = vpow.pop %v279
    %v281 = vadd.f32 %v280, 1.0
    %v282 = vrcp.pop %v281
    %v283 = vmul.f32 1.0, %v282
    %v284 = vmul.f32 %v276, %v114
    %v285 = vmul.f32 %v270, %v277
    %v286 = vadd.f32 %v284, %v285
    %v287 = vtanh.pop %v286
    %v288 = vmul.f32 %v283, %v287
    %s289 = scalar_lea.vmem [#allocation4], 32
    %v290 = vld [vmem:[%s289] sm:$0xff]
    %v291 = vld [vmem:[%s289 + $0x8] sm:$0xff]
    %v292 = vld [vmem:[%s289 + $0x10] sm:$0xff]
    %v293 = vld [vmem:[%s289 + $0x18] sm:$0xff]
    %294 = vmatprep.subr.mxu0 %v50
    %295 = vmatpush1.msra.mxu0 %v49
    %296 = vmatprep.subr.mxu0 %v54
    %297 = vmatpush1.msra.mxu0 %v53
    %298 = vmatprep.subr.mxu0 %v58
    %299 = vmatpush1.msra.mxu0 %v57
    %300 = vmatprep.subr.mxu0 %v62
    %301 = vmatpush1.msra.mxu0 %v61
    %302 = vmatprep.subr.mxu0 %v66
    %303 = vmatpush1.msra.mxu0 %v65
    %304 = vmatprep.subr.mxu0 %v70
    %305 = vmatpush1.msra.mxu0 %v69
    %306 = vmatprep.subr.mxu0 %v74
    %307 = vmatpush1.msra.mxu0 %v73
    %308 = vmatprep.subr.mxu0 %v78
    %309 = vmatpush1.msra.mxu0 %v77
    %310 = vmatprep.subr.mxu0 %v82
    %311 = vmatpush1.msra.mxu0 %v81
    %312 = vmatprep.subr.mxu0 %v86
    %313 = vmatpush1.msra.mxu0 %v85
    %314 = vmatprep.subr.mxu0 %v90
    %315 = vmatpush1.msra.mxu0 %v89
    %316 = vmatprep.subr.mxu0 %v94
    %317 = vmatpush1.msra.mxu0 %v93
    %318 = vmatprep.subr.mxu0 %v98
    %319 = vmatpush1.msra.mxu0 %v97
    %320 = vmatprep.subr.mxu0 %v102
    %321 = vmatpush1.msra.mxu0 %v101
    %322 = vmatprep.subr.mxu0 %v106
    %323 = vmatpush1.msra.mxu0 %v105
    %324 = vmatprep.subr.mxu0 %v110
    %325 = vmatpush1.msra.mxu0 %v109
    %326 = vmatprep.subr.mxu0 0.0
    %327 = vmatpush1.msra.mxu0 0.0
    %328 = vmatprep.subr.mxu0 0.0
    %329 = vmatpush1.msra.mxu0 0.0
    %330 = vmatprep.subr.mxu0 0.0
    %331 = vmatpush1.msra.mxu0 0.0
    %332 = vmatprep.subr.mxu0 0.0
    %333 = vmatpush1.msra.mxu0 0.0
    %334 = vmatprep.subr.mxu0 0.0
    %335 = vmatpush1.msra.mxu0 0.0
    %336 = vmatprep.subr.mxu0 0.0
    %337 = vmatpush1.msra.mxu0 0.0
    %338 = vmatprep.subr.mxu0 0.0
    %339 = vmatpush1.msra.mxu0 0.0
    %340 = vmatprep.subr.mxu0 0.0
    %341 = vmatpush1.msra.mxu0 0.0
    %342 = vmatprep.subr.mxu0 0.0
    %343 = vmatpush1.msra.mxu0 0.0
    %344 = vmatprep.subr.mxu0 0.0
    %345 = vmatpush1.msra.mxu0 0.0
    %346 = vmatprep.subr.mxu0 0.0
    %347 = vmatpush1.msra.mxu0 0.0
    %348 = vmatprep.subr.mxu0 0.0
    %349 = vmatpush1.msra.mxu0 0.0
    %350 = vmatprep.subr.mxu0 0.0
    %351 = vmatpush1.msra.mxu0 0.0
    %352 = vmatprep.subr.mxu0 0.0
    %353 = vmatpush1.msra.mxu0 0.0
    %354 = vmatprep.subr.mxu0 0.0
    %355 = vmatpush1.msra.mxu0 0.0
    %356 = vmatprep.subr.mxu0 0.0
    %357 = vmatpush1.msra.mxu0 0.0
    %358 = vmatprep.mubr.f32.mxu0 0.0
    %359 = vmatmul.mubr.f32.gmra.mrb[0].mxu0 %v288
    %v360 = vpop.f32.mrb[0].mxu0
    %v361 = vadd.f32 0.0, %v360
    %v362 = vpop.f32.mrb[0].mxu0
    %v363 = vadd.f32 0.0, %v362
    %364 = vdwg.mxu0
    %365 = vmatprep.subr.mxu0 %v52
    %366 = vmatpush1.msra.mxu0 %v51
    %367 = vmatprep.subr.mxu0 %v56
    %368 = vmatpush1.msra.mxu0 %v55
    %369 = vmatprep.subr.mxu0 %v60
    %370 = vmatpush1.msra.mxu0 %v59
    %371 = vmatprep.subr.mxu0 %v64
    %372 = vmatpush1.msra.mxu0 %v63
    %373 = vmatprep.subr.mxu0 %v68
    %374 = vmatpush1.msra.mxu0 %v67
    %375 = vmatprep.subr.mxu0 %v72
    %376 = vmatpush1.msra.mxu0 %v71
    %377 = vmatprep.subr.mxu0 %v76
    %378 = vmatpush1.msra.mxu0 %v75
    %379 = vmatprep.subr.mxu0 %v80
    %380 = vmatpush1.msra.mxu0 %v79
    %381 = vmatprep.subr.mxu0 %v84
    %382 = vmatpush1.msra.mxu0 %v83
    %383 = vmatprep.subr.mxu0 %v88
    %384 = vmatpush1.msra.mxu0 %v87
    %385 = vmatprep.subr.mxu0 %v92
    %386 = vmatpush1.msra.mxu0 %v91
    %387 = vmatprep.subr.mxu0 %v96
    %388 = vmatpush1.msra.mxu0 %v95
    %389 = vmatprep.subr.mxu0 %v100
    %390 = vmatpush1.msra.mxu0 %v99
    %391 = vmatprep.subr.mxu0 %v104
    %392 = vmatpush1.msra.mxu0 %v103
    %393 = vmatprep.subr.mxu0 %v108
    %394 = vmatpush1.msra.mxu0 %v107
    %395 = vmatprep.subr.mxu0 %v112
    %396 = vmatpush1.msra.mxu0 %v111
    %397 = vmatprep.subr.mxu0 0.0
    %398 = vmatpush1.msra.mxu0 0.0
    %399 = vmatprep.subr.mxu0 0.0
    %400 = vmatpush1.msra.mxu0 0.0
    %401 = vmatprep.subr.mxu0 0.0
    %402 = vmatpush1.msra.mxu0 0.0
    %403 = vmatprep.subr.mxu0 0.0
    %404 = vmatpush1.msra.mxu0 0.0
    %405 = vmatprep.subr.mxu0 0.0
    %406 = vmatpush1.msra.mxu0 0.0
    %407 = vmatprep.subr.mxu0 0.0
    %408 = vmatpush1.msra.mxu0 0.0
    %409 = vmatprep.subr.mxu0 0.0
    %410 = vmatpush1.msra.mxu0 0.0
    %411 = vmatprep.subr.mxu0 0.0
    %412 = vmatpush1.msra.mxu0 0.0
    %413 = vmatprep.subr.mxu0 0.0
    %414 = vmatpush1.msra.mxu0 0.0
    %415 = vmatprep.subr.mxu0 0.0
    %416 = vmatpush1.msra.mxu0 0.0
    %417 = vmatprep.subr.mxu0 0.0
    %418 = vmatpush1.msra.mxu0 0.0
    %419 = vmatprep.subr.mxu0 0.0
    %420 = vmatpush1.msra.mxu0 0.0
    %421 = vmatprep.subr.mxu0 0.0
    %422 = vmatpush1.msra.mxu0 0.0
    %423 = vmatprep.subr.mxu0 0.0
    %424 = vmatpush1.msra.mxu0 0.0
    %425 = vmatprep.subr.mxu0 0.0
    %426 = vmatpush1.msra.mxu0 0.0
    %427 = vmatprep.subr.mxu0 0.0
    %428 = vmatpush1.msra.mxu0 0.0
    %429 = vmatprep.mubr.f32.mxu0 0.0
    %430 = vmatmul.mubr.f32.gmra.mrb[0].mxu0 %v288
    %v431 = vpop.f32.mrb[0].mxu0
    %v432 = vadd.f32 0.0, %v431
    %v433 = vpop.f32.mrb[0].mxu0
    %v434 = vadd.f32 0.0, %v433
    %435 = vdwg.mxu0
    %v436 = vadd.f32 %v290, %v361
    %v437 = vadd.f32 %v291, %v363
    %v438 = vadd.f32 %v292, %v432
    %v439 = vadd.f32 %v293, %v434
    %v440 = vxor.u32 %v436, 2147483648
    %v441 = vmul.f32 %v440, 1.442695
    %v442 = vpow.pop %v441
    %v443 = vadd.f32 %v442, 1.0
    %v444 = vrcp.pop %v443
    %v445 = vmul.f32 1.0, %v444
    %v446 = vxor.u32 %v437, 2147483648
    %v447 = vmul.f32 %v446, 1.442695
    %v448 = vpow.pop %v447
    %v449 = vadd.f32 %v448, 1.0
    %v450 = vrcp.pop %v449
    %v451 = vmul.f32 1.0, %v450
    %v452 = vtanh.pop %v438
    %v453 = vxor.u32 %v439, 2147483648
    %v454 = vmul.f32 %v453, 1.442695
    %v455 = vpow.pop %v454
    %v456 = vadd.f32 %v455, 1.0
    %v457 = vrcp.pop %v456
    %v458 = vmul.f32 1.0, %v457
    %v459 = vmul.f32 %v451, %v286
    %v460 = vmul.f32 %v445, %v452
    %v461 = vadd.f32 %v459, %v460
    %v462 = vtanh.pop %v461
    %v463 = vmul.f32 %v458, %v462
    %s464 = scalar_lea.vmem [#allocation4], 64
    %v465 = vld [vmem:[%s464] sm:$0xff]
    %v466 = vld [vmem:[%s464 + $0x8] sm:$0xff]
    %v467 = vld [vmem:[%s464 + $0x10] sm:$0xff]
    %v468 = vld [vmem:[%s464 + $0x18] sm:$0xff]
    %469 = vmatprep.subr.mxu0 %v50
    %470 = vmatpush1.msra.mxu0 %v49
    %471 = vmatprep.subr.mxu0 %v54
    %472 = vmatpush1.msra.mxu0 %v53
    %473 = vmatprep.subr.mxu0 %v58
    %474 = vmatpush1.msra.mxu0 %v57
    %475 = vmatprep.subr.mxu0 %v62
    %476 = vmatpush1.msra.mxu0 %v61
    %477 = vmatprep.subr.mxu0 %v66
    %478 = vmatpush1.msra.mxu0 %v65
    %479 = vmatprep.subr.mxu0 %v70
    %480 = vmatpush1.msra.mxu0 %v69
    %481 = vmatprep.subr.mxu0 %v74
    %482 = vmatpush1.msra.mxu0 %v73
    %483 = vmatprep.subr.mxu0 %v78
    %484 = vmatpush1.msra.mxu0 %v77
    %485 = vmatprep.subr.mxu0 %v82
    %486 = vmatpush1.msra.mxu0 %v81
    %487 = vmatprep.subr.mxu0 %v86
    %488 = vmatpush1.msra.mxu0 %v85
    %489 = vmatprep.subr.mxu0 %v90
    %490 = vmatpush1.msra.mxu0 %v89
    %491 = vmatprep.subr.mxu0 %v94
    %492 = vmatpush1.msra.mxu0 %v93
    %493 = vmatprep.subr.mxu0 %v98
    %494 = vmatpush1.msra.mxu0 %v97
    %495 = vmatprep.subr.mxu0 %v102
    %496 = vmatpush1.msra.mxu0 %v101
    %497 = vmatprep.subr.mxu0 %v106
    %498 = vmatpush1.msra.mxu0 %v105
    %499 = vmatprep.subr.mxu0 %v110
    %500 = vmatpush1.msra.mxu0 %v109
    %501 = vmatprep.subr.mxu0 0.0
    %502 = vmatpush1.msra.mxu0 0.0
    %503 = vmatprep.subr.mxu0 0.0
    %504 = vmatpush1.msra.mxu0 0.0
    %505 = vmatprep.subr.mxu0 0.0
    %506 = vmatpush1.msra.mxu0 0.0
    %507 = vmatprep.subr.mxu0 0.0
    %508 = vmatpush1.msra.mxu0 0.0
    %509 = vmatprep.subr.mxu0 0.0
    %510 = vmatpush1.msra.mxu0 0.0
    %511 = vmatprep.subr.mxu0 0.0
    %512 = vmatpush1.msra.mxu0 0.0
    %513 = vmatprep.subr.mxu0 0.0
    %514 = vmatpush1.msra.mxu0 0.0
    %515 = vmatprep.subr.mxu0 0.0
    %516 = vmatpush1.msra.mxu0 0.0
    %517 = vmatprep.subr.mxu0 0.0
    %518 = vmatpush1.msra.mxu0 0.0
    %519 = vmatprep.subr.mxu0 0.0
    %520 = vmatpush1.msra.mxu0 0.0
    %521 = vmatprep.subr.mxu0 0.0
    %522 = vmatpush1.msra.mxu0 0.0
    %523 = vmatprep.subr.mxu0 0.0
    %524 = vmatpush1.msra.mxu0 0.0
    %525 = vmatprep.subr.mxu0 0.0
    %526 = vmatpush1.msra.mxu0 0.0
    %527 = vmatprep.subr.mxu0 0.0
    %528 = vmatpush1.msra.mxu0 0.0
    %529 = vmatprep.subr.mxu0 0.0
    %530 = vmatpush1.msra.mxu0 0.0
    %531 = vmatprep.subr.mxu0 0.0
    %532 = vmatpush1.msra.mxu0 0.0
    %533 = vmatprep.mubr.f32.mxu0 0.0
    %534 = vmatmul.mubr.f32.gmra.mrb[0].mxu0 %v463
    %v535 = vpop.f32.mrb[0].mxu0
    %v536 = vadd.f32 0.0, %v535
    %v537 = vpop.f32.mrb[0].mxu0
    %v538 = vadd.f32 0.0, %v537
    %539 = vdwg.mxu0
    %540 = vmatprep.subr.mxu0 %v52
    %541 = vmatpush1.msra.mxu0 %v51
    %542 = vmatprep.subr.mxu0 %v56
    %543 = vmatpush1.msra.mxu0 %v55
    %544 = vmatprep.subr.mxu0 %v60
    %545 = vmatpush1.msra.mxu0 %v59
    %546 = vmatprep.subr.mxu0 %v64
    %547 = vmatpush1.msra.mxu0 %v63
    %548 = vmatprep.subr.mxu0 %v68
    %549 = vmatpush1.msra.mxu0 %v67
    %550 = vmatprep.subr.mxu0 %v72
    %551 = vmatpush1.msra.mxu0 %v71
    %552 = vmatprep.subr.mxu0 %v76
    %553 = vmatpush1.msra.mxu0 %v75
    %554 = vmatprep.subr.mxu0 %v80
    %555 = vmatpush1.msra.mxu0 %v79
    %556 = vmatprep.subr.mxu0 %v84
    %557 = vmatpush1.msra.mxu0 %v83
    %558 = vmatprep.subr.mxu0 %v88
    %559 = vmatpush1.msra.mxu0 %v87
    %560 = vmatprep.subr.mxu0 %v92
    %561 = vmatpush1.msra.mxu0 %v91
    %562 = vmatprep.subr.mxu0 %v96
    %563 = vmatpush1.msra.mxu0 %v95
    %564 = vmatprep.subr.mxu0 %v100
    %565 = vmatpush1.msra.mxu0 %v99
    %566 = vmatprep.subr.mxu0 %v104
    %567 = vmatpush1.msra.mxu0 %v103
    %568 = vmatprep.subr.mxu0 %v108
    %569 = vmatpush1.msra.mxu0 %v107
    %570 = vmatprep.subr.mxu0 %v112
    %571 = vmatpush1.msra.mxu0 %v111
    %572 = vmatprep.subr.mxu0 0.0
    %573 = vmatpush1.msra.mxu0 0.0
    %574 = vmatprep.subr.mxu0 0.0
    %575 = vmatpush1.msra.mxu0 0.0
    %576 = vmatprep.subr.mxu0 0.0
    %577 = vmatpush1.msra.mxu0 0.0
    %578 = vmatprep.subr.mxu0 0.0
    %579 = vmatpush1.msra.mxu0 0.0
    %580 = vmatprep.subr.mxu0 0.0
    %581 = vmatpush1.msra.mxu0 0.0
    %582 = vmatprep.subr.mxu0 0.0
    %583 = vmatpush1.msra.mxu0 0.0
    %584 = vmatprep.subr.mxu0 0.0
    %585 = vmatpush1.msra.mxu0 0.0
    %586 = vmatprep.subr.mxu0 0.0
    %587 = vmatpush1.msra.mxu0 0.0
    %588 = vmatprep.subr.mxu0 0.0
    %589 = vmatpush1.msra.mxu0 0.0
    %590 = vmatprep.subr.mxu0 0.0
    %591 = vmatpush1.msra.mxu0 0.0
    %592 = vmatprep.subr.mxu0 0.0
    %593 = vmatpush1.msra.mxu0 0.0
    %594 = vmatprep.subr.mxu0 0.0
    %595 = vmatpush1.msra.mxu0 0.0
    %596 = vmatprep.subr.mxu0 0.0
    %597 = vmatpush1.msra.mxu0 0.0
    %598 = vmatprep.subr.mxu0 0.0
    %599 = vmatpush1.msra.mxu0 0.0
    %600 = vmatprep.subr.mxu0 0.0
    %601 = vmatpush1.msra.mxu0 0.0
    %602 = vmatprep.subr.mxu0 0.0
    %603 = vmatpush1.msra.mxu0 0.0
    %604 = vmatprep.mubr.f32.mxu0 0.0
    %605 = vmatmul.mubr.f32.gmra.mrb[0].mxu0 %v463
    %v606 = vpop.f32.mrb[0].mxu0
    %v607 = vadd.f32 0.0, %v606
    %v608 = vpop.f32.mrb[0].mxu0
    %v609 = vadd.f32 0.0, %v608
    %610 = vdwg.mxu0
    %v611 = vadd.f32 %v465, %v536
    %v612 = vadd.f32 %v466, %v538
    %v613 = vadd.f32 %v467, %v607
    %v614 = vadd.f32 %v468, %v609
    %v615 = vxor.u32 %v611, 2147483648
    %v616 = vmul.f32 %v615, 1.442695
    %v617 = vpow.pop %v616
    %v618 = vadd.f32 %v617, 1.0
    %v619 = vrcp.pop %v618
    %v620 = vmul.f32 1.0, %v619
    %v621 = vxor.u32 %v612, 2147483648
    %v622 = vmul.f32 %v621, 1.442695
    %v623 = vpow.pop %v622
    %v624 = vadd.f32 %v623, 1.0
    %v625 = vrcp.pop %v624
    %v626 = vmul.f32 1.0, %v625
    %v627 = vtanh.pop %v613
    %v628 = vxor.u32 %v614, 2147483648
    %v629 = vmul.f32 %v628, 1.442695
    %v630 = vpow.pop %v629
    %v631 = vadd.f32 %v630, 1.0
    %v632 = vrcp.pop %v631
    %v633 = vmul.f32 1.0, %v632
    %v634 = vmul.f32 %v626, %v461
    %v635 = vmul.f32 %v620, %v627
    %v636 = vadd.f32 %v634, %v635
    %v637 = vtanh.pop %v636
    %v638 = vmul.f32 %v633, %v637
    %s639 = scalar_lea.vmem [#allocation4], 96
    %v640 = vld [vmem:[%s639] sm:$0xff]
    %v641 = vld [vmem:[%s639 + $0x8] sm:$0xff]
    %v642 = vld [vmem:[%s639 + $0x10] sm:$0xff]
    %v643 = vld [vmem:[%s639 + $0x18] sm:$0xff]
    %644 = vmatprep.subr.mxu0 %v50
    %645 = vmatpush1.msra.mxu0 %v49
    %646 = vmatprep.subr.mxu0 %v54
    %647 = vmatpush1.msra.mxu0 %v53
    %648 = vmatprep.subr.mxu0 %v58
    %649 = vmatpush1.msra.mxu0 %v57
    %650 = vmatprep.subr.mxu0 %v62
    %651 = vmatpush1.msra.mxu0 %v61
    %652 = vmatprep.subr.mxu0 %v66
    %653 = vmatpush1.msra.mxu0 %v65
    %654 = vmatprep.subr.mxu0 %v70
    %655 = vmatpush1.msra.mxu0 %v69
    %656 = vmatprep.subr.mxu0 %v74
    %657 = vmatpush1.msra.mxu0 %v73
    %658 = vmatprep.subr.mxu0 %v78
    %659 = vmatpush1.msra.mxu0 %v77
    %660 = vmatprep.subr.mxu0 %v82
    %661 = vmatpush1.msra.mxu0 %v81
    %662 = vmatprep.subr.mxu0 %v86
    %663 = vmatpush1.msra.mxu0 %v85
    %664 = vmatprep.subr.mxu0 %v90
    %665 = vmatpush1.msra.mxu0 %v89
    %666 = vmatprep.subr.mxu0 %v94
    %667 = vmatpush1.msra.mxu0 %v93
    %668 = vmatprep.subr.mxu0 %v98
    %669 = vmatpush1.msra.mxu0 %v97
    %670 = vmatprep.subr.mxu0 %v102
    %671 = vmatpush1.msra.mxu0 %v101
    %672 = vmatprep.subr.mxu0 %v106
    %673 = vmatpush1.msra.mxu0 %v105
    %674 = vmatprep.subr.mxu0 %v110
    %675 = vmatpush1.msra.mxu0 %v109
    %676 = vmatprep.subr.mxu0 0.0
    %677 = vmatpush1.msra.mxu0 0.0
    %678 = vmatprep.subr.mxu0 0.0
    %679 = vmatpush1.msra.mxu0 0.0
    %680 = vmatprep.subr.mxu0 0.0
    %681 = vmatpush1.msra.mxu0 0.0
    %682 = vmatprep.subr.mxu0 0.0
    %683 = vmatpush1.msra.mxu0 0.0
    %684 = vmatprep.subr.mxu0 0.0
    %685 = vmatpush1.msra.mxu0 0.0
    %686 = vmatprep.subr.mxu0 0.0
    %687 = vmatpush1.msra.mxu0 0.0
    %688 = vmatprep.subr.mxu0 0.0
    %689 = vmatpush1.msra.mxu0 0.0
    %690 = vmatprep.subr.mxu0 0.0
    %691 = vmatpush1.msra.mxu0 0.0
    %692 = vmatprep.subr.mxu0 0.0
    %693 = vmatpush1.msra.mxu0 0.0
    %694 = vmatprep.subr.mxu0 0.0
    %695 = vmatpush1.msra.mxu0 0.0
    %696 = vmatprep.subr.mxu0 0.0
    %697 = vmatpush1.msra.mxu0 0.0
    %698 = vmatprep.subr.mxu0 0.0
    %699 = vmatpush1.msra.mxu0 0.0
    %700 = vmatprep.subr.mxu0 0.0
    %701 = vmatpush1.msra.mxu0 0.0
    %702 = vmatprep.subr.mxu0 0.0
    %703 = vmatpush1.msra.mxu0 0.0
    %704 = vmatprep.subr.mxu0 0.0
    %705 = vmatpush1.msra.mxu0 0.0
    %706 = vmatprep.subr.mxu0 0.0
    %707 = vmatpush1.msra.mxu0 0.0
    %708 = vmatprep.mubr.f32.mxu0 0.0
    %709 = vmatmul.mubr.f32.gmra.mrb[0].mxu0 %v638
    %v710 = vpop.f32.mrb[0].mxu0
    %v711 = vadd.f32 0.0, %v710
    %v712 = vpop.f32.mrb[0].mxu0
    %v713 = vadd.f32 0.0, %v712
    %714 = vdwg.mxu0
    %715 = vmatprep.subr.mxu0 %v52
    %716 = vmatpush1.msra.mxu0 %v51
    %717 = vmatprep.subr.mxu0 %v56
    %718 = vmatpush1.msra.mxu0 %v55
    %719 = vmatprep.subr.mxu0 %v60
    %720 = vmatpush1.msra.mxu0 %v59
    %721 = vmatprep.subr.mxu0 %v64
    %722 = vmatpush1.msra.mxu0 %v63
    %723 = vmatprep.subr.mxu0 %v68
    %724 = vmatpush1.msra.mxu0 %v67
    %725 = vmatprep.subr.mxu0 %v72
    %726 = vmatpush1.msra.mxu0 %v71
    %727 = vmatprep.subr.mxu0 %v76
    %728 = vmatpush1.msra.mxu0 %v75
    %729 = vmatprep.subr.mxu0 %v80
    %730 = vmatpush1.msra.mxu0 %v79
    %731 = vmatprep.subr.mxu0 %v84
    %732 = vmatpush1.msra.mxu0 %v83
    %733 = vmatprep.subr.mxu0 %v88
    %734 = vmatpush1.msra.mxu0 %v87
    %735 = vmatprep.subr.mxu0 %v92
    %736 = vmatpush1.msra.mxu0 %v91
    %737 = vmatprep.subr.mxu0 %v96
    %738 = vmatpush1.msra.mxu0 %v95
    %739 = vmatprep.subr.mxu0 %v100
    %740 = vmatpush1.msra.mxu0 %v99
    %741 = vmatprep.subr.mxu0 %v104
    %742 = vmatpush1.msra.mxu0 %v103
    %743 = vmatprep.subr.mxu0 %v108
    %744 = vmatpush1.msra.mxu0 %v107
    %745 = vmatprep.subr.mxu0 %v112
    %746 = vmatpush1.msra.mxu0 %v111
    %747 = vmatprep.subr.mxu0 0.0
    %748 = vmatpush1.msra.mxu0 0.0
    %749 = vmatprep.subr.mxu0 0.0
    %750 = vmatpush1.msra.mxu0 0.0
    %751 = vmatprep.subr.mxu0 0.0
    %752 = vmatpush1.msra.mxu0 0.0
    %753 = vmatprep.subr.mxu0 0.0
    %754 = vmatpush1.msra.mxu0 0.0
    %755 = vmatprep.subr.mxu0 0.0
    %756 = vmatpush1.msra.mxu0 0.0
    %757 = vmatprep.subr.mxu0 0.0
    %758 = vmatpush1.msra.mxu0 0.0
    %759 = vmatprep.subr.mxu0 0.0
    %760 = vmatpush1.msra.mxu0 0.0
    %761 = vmatprep.subr.mxu0 0.0
    %762 = vmatpush1.msra.mxu0 0.0
    %763 = vmatprep.subr.mxu0 0.0
    %764 = vmatpush1.msra.mxu0 0.0
    %765 = vmatprep.subr.mxu0 0.0
    %766 = vmatpush1.msra.mxu0 0.0
    %767 = vmatprep.subr.mxu0 0.0
    %768 = vmatpush1.msra.mxu0 0.0
    %769 = vmatprep.subr.mxu0 0.0
    %770 = vmatpush1.msra.mxu0 0.0
    %771 = vmatprep.subr.mxu0 0.0
    %772 = vmatpush1.msra.mxu0 0.0
    %773 = vmatprep.subr.mxu0 0.0
    %774 = vmatpush1.msra.mxu0 0.0
    %775 = vmatprep.subr.mxu0 0.0
    %776 = vmatpush1.msra.mxu0 0.0
    %777 = vmatprep.subr.mxu0 0.0
    %778 = vmatpush1.msra.mxu0 0.0
    %779 = vmatprep.mubr.f32.mxu0 0.0
    %780 = vmatmul.mubr.f32.gmra.mrb[0].mxu0 %v638
    %v781 = vpop.f32.mrb[0].mxu0
    %v782 = vadd.f32 0.0, %v781
    %v783 = vpop.f32.mrb[0].mxu0
    %v784 = vadd.f32 0.0, %v783
    %785 = vdwg.mxu0
    %v786 = vadd.f32 %v640, %v711
    %v787 = vadd.f32 %v641, %v713
    %v788 = vadd.f32 %v642, %v782
    %v789 = vadd.f32 %v643, %v784
    %v790 = vxor.u32 %v786, 2147483648
    %v791 = vmul.f32 %v790, 1.442695
    %v792 = vpow.pop %v791
    %v793 = vadd.f32 %v792, 1.0
    %v794 = vrcp.pop %v793
    %v795 = vmul.f32 1.0, %v794
    %v796 = vxor.u32 %v787, 2147483648
    %v797 = vmul.f32 %v796, 1.442695
    %v798 = vpow.pop %v797
    %v799 = vadd.f32 %v798, 1.0
    %v800 = vrcp.pop %v799
    %v801 = vmul.f32 1.0, %v800
    %v802 = vtanh.pop %v788
    %v803 = vxor.u32 %v789, 2147483648
    %v804 = vmul.f32 %v803, 1.442695
    %v805 = vpow.pop %v804
    %v806 = vadd.f32 %v805, 1.0
    %v807 = vrcp.pop %v806
    %v808 = vmul.f32 1.0, %v807
    %v809 = vmul.f32 %v801, %v636
    %v810 = vmul.f32 %v795, %v802
    %v811 = vadd.f32 %v809, %v810
    %v812 = vtanh.pop %v811
    %v813 = vmul.f32 %v808, %v812
    %s814 = scalar_lea.vmem [#allocation4], 128
    %v815 = vld [vmem:[%s814] sm:$0xff]
    %v816 = vld [vmem:[%s814 + $0x8] sm:$0xff]
    %v817 = vld [vmem:[%s814 + $0x10] sm:$0xff]
    %v818 = vld [vmem:[%s814 + $0x18] sm:$0xff]
    %819 = vmatprep.subr.mxu0 %v50
    %820 = vmatpush1.msra.mxu0 %v49
    %821 = vmatprep.subr.mxu0 %v54
    %822 = vmatpush1.msra.mxu0 %v53
    %823 = vmatprep.subr.mxu0 %v58
    %824 = vmatpush1.msra.mxu0 %v57
    %825 = vmatprep.subr.mxu0 %v62
    %826 = vmatpush1.msra.mxu0 %v61
    %827 = vmatprep.subr.mxu0 %v66
    %828 = vmatpush1.msra.mxu0 %v65
    %829 = vmatprep.subr.mxu0 %v70
    %830 = vmatpush1.msra.mxu0 %v69
    %831 = vmatprep.subr.mxu0 %v74
    %832 = vmatpush1.msra.mxu0 %v73
    %833 = vmatprep.subr.mxu0 %v78
    %834 = vmatpush1.msra.mxu0 %v77
    %835 = vmatprep.subr.mxu0 %v82
    %836 = vmatpush1.msra.mxu0 %v81
    %837 = vmatprep.subr.mxu0 %v86
    %838 = vmatpush1.msra.mxu0 %v85
    %839 = vmatprep.subr.mxu0 %v90
    %840 = vmatpush1.msra.mxu0 %v89
    %841 = vmatprep.subr.mxu0 %v94
    %842 = vmatpush1.msra.mxu0 %v93
    %843 = vmatprep.subr.mxu0 %v98
    %844 = vmatpush1.msra.mxu0 %v97
    %845 = vmatprep.subr.mxu0 %v102
    %846 = vmatpush1.msra.mxu0 %v101
    %847 = vmatprep.subr.mxu0 %v106
    %848 = vmatpush1.msra.mxu0 %v105
    %849 = vmatprep.subr.mxu0 %v110
    %850 = vmatpush1.msra.mxu0 %v109
    %851 = vmatprep.subr.mxu0 0.0
    %852 = vmatpush1.msra.mxu0 0.0
    %853 = vmatprep.subr.mxu0 0.0
    %854 = vmatpush1.msra.mxu0 0.0
    %855 = vmatprep.subr.mxu0 0.0
    %856 = vmatpush1.msra.mxu0 0.0
    %857 = vmatprep.subr.mxu0 0.0
    %858 = vmatpush1.msra.mxu0 0.0
    %859 = vmatprep.subr.mxu0 0.0
    %860 = vmatpush1.msra.mxu0 0.0
    %861 = vmatprep.subr.mxu0 0.0
    %862 = vmatpush1.msra.mxu0 0.0
    %863 = vmatprep.subr.mxu0 0.0
    %864 = vmatpush1.msra.mxu0 0.0
    %865 = vmatprep.subr.mxu0 0.0
    %866 = vmatpush1.msra.mxu0 0.0
    %867 = vmatprep.subr.mxu0 0.0
    %868 = vmatpush1.msra.mxu0 0.0
    %869 = vmatprep.subr.mxu0 0.0
    %870 = vmatpush1.msra.mxu0 0.0
    %871 = vmatprep.subr.mxu0 0.0
    %872 = vmatpush1.msra.mxu0 0.0
    %873 = vmatprep.subr.mxu0 0.0
    %874 = vmatpush1.msra.mxu0 0.0
    %875 = vmatprep.subr.mxu0 0.0
    %876 = vmatpush1.msra.mxu0 0.0
    %877 = vmatprep.subr.mxu0 0.0
    %878 = vmatpush1.msra.mxu0 0.0
    %879 = vmatprep.subr.mxu0 0.0
    %880 = vmatpush1.msra.mxu0 0.0
    %881 = vmatprep.subr.mxu0 0.0
    %882 = vmatpush1.msra.mxu0 0.0
    %883 = vmatprep.mubr.f32.mxu0 0.0
    %884 = vmatmul.mubr.f32.gmra.mrb[0].mxu0 %v813
    %v885 = vpop.f32.mrb[0].mxu0
    %v886 = vadd.f32 0.0, %v885
    %v887 = vpop.f32.mrb[0].mxu0
    %v888 = vadd.f32 0.0, %v887
    %889 = vdwg.mxu0
    %890 = vmatprep.subr.mxu0 %v52
    %891 = vmatpush1.msra.mxu0 %v51
    %892 = vmatprep.subr.mxu0 %v56
    %893 = vmatpush1.msra.mxu0 %v55
    %894 = vmatprep.subr.mxu0 %v60
    %895 = vmatpush1.msra.mxu0 %v59
    %896 = vmatprep.subr.mxu0 %v64
    %897 = vmatpush1.msra.mxu0 %v63
    %898 = vmatprep.subr.mxu0 %v68
    %899 = vmatpush1.msra.mxu0 %v67
    %900 = vmatprep.subr.mxu0 %v72
    %901 = vmatpush1.msra.mxu0 %v71
    %902 = vmatprep.subr.mxu0 %v76
    %903 = vmatpush1.msra.mxu0 %v75
    %904 = vmatprep.subr.mxu0 %v80
    %905 = vmatpush1.msra.mxu0 %v79
    %906 = vmatprep.subr.mxu0 %v84
    %907 = vmatpush1.msra.mxu0 %v83
    %908 = vmatprep.subr.mxu0 %v88
    %909 = vmatpush1.msra.mxu0 %v87
    %910 = vmatprep.subr.mxu0 %v92
    %911 = vmatpush1.msra.mxu0 %v91
    %912 = vmatprep.subr.mxu0 %v96
    %913 = vmatpush1.msra.mxu0 %v95
    %914 = vmatprep.subr.mxu0 %v100
    %915 = vmatpush1.msra.mxu0 %v99
    %916 = vmatprep.subr.mxu0 %v104
    %917 = vmatpush1.msra.mxu0 %v103
    %918 = vmatprep.subr.mxu0 %v108
    %919 = vmatpush1.msra.mxu0 %v107
    %920 = vmatprep.subr.mxu0 %v112
    %921 = vmatpush1.msra.mxu0 %v111
    %922 = vmatprep.subr.mxu0 0.0
    %923 = vmatpush1.msra.mxu0 0.0
    %924 = vmatprep.subr.mxu0 0.0
    %925 = vmatpush1.msra.mxu0 0.0
    %926 = vmatprep.subr.mxu0 0.0
    %927 = vmatpush1.msra.mxu0 0.0
    %928 = vmatprep.subr.mxu0 0.0
    %929 = vmatpush1.msra.mxu0 0.0
    %930 = vmatprep.subr.mxu0 0.0
    %931 = vmatpush1.msra.mxu0 0.0
    %932 = vmatprep.subr.mxu0 0.0
    %933 = vmatpush1.msra.mxu0 0.0
    %934 = vmatprep.subr.mxu0 0.0
    %935 = vmatpush1.msra.mxu0 0.0
    %936 = vmatprep.subr.mxu0 0.0
    %937 = vmatpush1.msra.mxu0 0.0
    %938 = vmatprep.subr.mxu0 0.0
    %939 = vmatpush1.msra.mxu0 0.0
    %940 = vmatprep.subr.mxu0 0.0
    %941 = vmatpush1.msra.mxu0 0.0
    %942 = vmatprep.subr.mxu0 0.0
    %943 = vmatpush1.msra.mxu0 0.0
    %944 = vmatprep.subr.mxu0 0.0
    %945 = vmatpush1.msra.mxu0 0.0
    %946 = vmatprep.subr.mxu0 0.0
    %947 = vmatpush1.msra.mxu0 0.0
    %948 = vmatprep.subr.mxu0 0.0
    %949 = vmatpush1.msra.mxu0 0.0
    %950 = vmatprep.subr.mxu0 0.0
    %951 = vmatpush1.msra.mxu0 0.0
    %952 = vmatprep.subr.mxu0 0.0
    %953 = vmatpush1.msra.mxu0 0.0
    %954 = vmatprep.mubr.f32.mxu0 0.0
    %955 = vmatmul.mubr.f32.gmra.mrb[0].mxu0 %v813
    %v956 = vpop.f32.mrb[0].mxu0
    %v957 = vadd.f32 0.0, %v956
    %v958 = vpop.f32.mrb[0].mxu0
    %v959 = vadd.f32 0.0, %v958
    %960 = vdwg.mxu0
    %v961 = vadd.f32 %v815, %v886
    %v962 = vadd.f32 %v816, %v888
    %v963 = vadd.f32 %v817, %v957
    %v964 = vadd.f32 %v818, %v959
    %v965 = vxor.u32 %v961, 2147483648
    %v966 = vmul.f32 %v965, 1.442695
    %v967 = vpow.pop %v966
    %v968 = vadd.f32 %v967, 1.0
    %v969 = vrcp.pop %v968
    %v970 = vmul.f32 1.0, %v969
    %v971 = vxor.u32 %v962, 2147483648
    %v972 = vmul.f32 %v971, 1.442695
    %v973 = vpow.pop %v972
    %v974 = vadd.f32 %v973, 1.0
    %v975 = vrcp.pop %v974
    %v976 = vmul.f32 1.0, %v975
    %v977 = vtanh.pop %v963
    %v978 = vxor.u32 %v964, 2147483648
    %v979 = vmul.f32 %v978, 1.442695
    %v980 = vpow.pop %v979
    %v981 = vadd.f32 %v980, 1.0
    %v982 = vrcp.pop %v981
    %v983 = vmul.f32 1.0, %v982
    %v984 = vmul.f32 %v976, %v811
    %v985 = vmul.f32 %v970, %v977
    %v986 = vadd.f32 %v984, %v985
    %v987 = vtanh.pop %v986
    %v988 = vmul.f32 %v983, %v987
    %s989 = scalar_lea.vmem [#allocation4], 160
    %v990 = vld [vmem:[%s989] sm:$0xff]
    %v991 = vld [vmem:[%s989 + $0x8] sm:$0xff]
    %v992 = vld [vmem:[%s989 + $0x10] sm:$0xff]
    %v993 = vld [vmem:[%s989 + $0x18] sm:$0xff]
    %994 = vmatprep.subr.mxu0 %v50
    %995 = vmatpush1.msra.mxu0 %v49
    %996 = vmatprep.subr.mxu0 %v54
    %997 = vmatpush1.msra.mxu0 %v53
    %998 = vmatprep.subr.mxu0 %v58
    %999 = vmatpush1.msra.mxu0 %v57
    %1000 = vmatprep.subr.mxu0 %v62
    %1001 = vmatpush1.msra.mxu0 %v61
    %1002 = vmatprep.subr.mxu0 %v66
    %1003 = vmatpush1.msra.mxu0 %v65
    %1004 = vmatprep.subr.mxu0 %v70
    %1005 = vmatpush1.msra.mxu0 %v69
    %1006 = vmatprep.subr.mxu0 %v74
    %1007 = vmatpush1.msra.mxu0 %v73
    %1008 = vmatprep.subr.mxu0 %v78
    %1009 = vmatpush1.msra.mxu0 %v77
    %1010 = vmatprep.subr.mxu0 %v82
    %1011 = vmatpush1.msra.mxu0 %v81
    %1012 = vmatprep.subr.mxu0 %v86
    %1013 = vmatpush1.msra.mxu0 %v85
    %1014 = vmatprep.subr.mxu0 %v90
    %1015 = vmatpush1.msra.mxu0 %v89
    %1016 = vmatprep.subr.mxu0 %v94
    %1017 = vmatpush1.msra.mxu0 %v93
    %1018 = vmatprep.subr.mxu0 %v98
    %1019 = vmatpush1.msra.mxu0 %v97
    %1020 = vmatprep.subr.mxu0 %v102
    %1021 = vmatpush1.msra.mxu0 %v101
    %1022 = vmatprep.subr.mxu0 %v106
    %1023 = vmatpush1.msra.mxu0 %v105
    %1024 = vmatprep.subr.mxu0 %v110
    %1025 = vmatpush1.msra.mxu0 %v109
    %1026 = vmatprep.subr.mxu0 0.0
    %1027 = vmatpush1.msra.mxu0 0.0
    %1028 = vmatprep.subr.mxu0 0.0
    %1029 = vmatpush1.msra.mxu0 0.0
    %1030 = vmatprep.subr.mxu0 0.0
    %1031 = vmatpush1.msra.mxu0 0.0
    %1032 = vmatprep.subr.mxu0 0.0
    %1033 = vmatpush1.msra.mxu0 0.0
    %1034 = vmatprep.subr.mxu0 0.0
    %1035 = vmatpush1.msra.mxu0 0.0
    %1036 = vmatprep.subr.mxu0 0.0
    %1037 = vmatpush1.msra.mxu0 0.0
    %1038 = vmatprep.subr.mxu0 0.0
    %1039 = vmatpush1.msra.mxu0 0.0
    %1040 = vmatprep.subr.mxu0 0.0
    %1041 = vmatpush1.msra.mxu0 0.0
    %1042 = vmatprep.subr.mxu0 0.0
    %1043 = vmatpush1.msra.mxu0 0.0
    %1044 = vmatprep.subr.mxu0 0.0
    %1045 = vmatpush1.msra.mxu0 0.0
    %1046 = vmatprep.subr.mxu0 0.0
    %1047 = vmatpush1.msra.mxu0 0.0
    %1048 = vmatprep.subr.mxu0 0.0
    %1049 = vmatpush1.msra.mxu0 0.0
    %1050 = vmatprep.subr.mxu0 0.0
    %1051 = vmatpush1.msra.mxu0 0.0
    %1052 = vmatprep.subr.mxu0 0.0
    %1053 = vmatpush1.msra.mxu0 0.0
    %1054 = vmatprep.subr.mxu0 0.0
    %1055 = vmatpush1.msra.mxu0 0.0
    %1056 = vmatprep.subr.mxu0 0.0
    %1057 = vmatpush1.msra.mxu0 0.0
    %1058 = vmatprep.mubr.f32.mxu0 0.0
    %1059 = vmatmul.mubr.f32.gmra.mrb[0].mxu0 %v988
    %v1060 = vpop.f32.mrb[0].mxu0
    %v1061 = vadd.f32 0.0, %v1060
    %v1062 = vpop.f32.mrb[0].mxu0
    %v1063 = vadd.f32 0.0, %v1062
    %1064 = vdwg.mxu0
    %1065 = vmatprep.subr.mxu0 %v52
    %1066 = vmatpush1.msra.mxu0 %v51
    %1067 = vmatprep.subr.mxu0 %v56
    %1068 = vmatpush1.msra.mxu0 %v55
    %1069 = vmatprep.subr.mxu0 %v60
    %1070 = vmatpush1.msra.mxu0 %v59
    %1071 = vmatprep.subr.mxu0 %v64
    %1072 = vmatpush1.msra.mxu0 %v63
    %1073 = vmatprep.subr.mxu0 %v68
    %1074 = vmatpush1.msra.mxu0 %v67
    %1075 = vmatprep.subr.mxu0 %v72
    %1076 = vmatpush1.msra.mxu0 %v71
    %1077 = vmatprep.subr.mxu0 %v76
    %1078 = vmatpush1.msra.mxu0 %v75
    %1079 = vmatprep.subr.mxu0 %v80
    %1080 = vmatpush1.msra.mxu0 %v79
    %1081 = vmatprep.subr.mxu0 %v84
    %1082 = vmatpush1.msra.mxu0 %v83
    %1083 = vmatprep.subr.mxu0 %v88
    %1084 = vmatpush1.msra.mxu0 %v87
    %1085 = vmatprep.subr.mxu0 %v92
    %1086 = vmatpush1.msra.mxu0 %v91
    %1087 = vmatprep.subr.mxu0 %v96
    %1088 = vmatpush1.msra.mxu0 %v95
    %1089 = vmatprep.subr.mxu0 %v100
    %1090 = vmatpush1.msra.mxu0 %v99
    %1091 = vmatprep.subr.mxu0 %v104
    %1092 = vmatpush1.msra.mxu0 %v103
    %1093 = vmatprep.subr.mxu0 %v108
    %1094 = vmatpush1.msra.mxu0 %v107
    %1095 = vmatprep.subr.mxu0 %v112
    %1096 = vmatpush1.msra.mxu0 %v111
    %1097 = vmatprep.subr.mxu0 0.0
    %1098 = vmatpush1.msra.mxu0 0.0
    %1099 = vmatprep.subr.mxu0 0.0
    %1100 = vmatpush1.msra.mxu0 0.0
    %1101 = vmatprep.subr.mxu0 0.0
    %1102 = vmatpush1.msra.mxu0 0.0
    %1103 = vmatprep.subr.mxu0 0.0
    %1104 = vmatpush1.msra.mxu0 0.0
    %1105 = vmatprep.subr.mxu0 0.0
    %1106 = vmatpush1.msra.mxu0 0.0
    %1107 = vmatprep.subr.mxu0 0.0
    %1108 = vmatpush1.msra.mxu0 0.0
    %1109 = vmatprep.subr.mxu0 0.0
    %1110 = vmatpush1.msra.mxu0 0.0
    %1111 = vmatprep.subr.mxu0 0.0
    %1112 = vmatpush1.msra.mxu0 0.0
    %1113 = vmatprep.subr.mxu0 0.0
    %1114 = vmatpush1.msra.mxu0 0.0
    %1115 = vmatprep.subr.mxu0 0.0
    %1116 = vmatpush1.msra.mxu0 0.0
    %1117 = vmatprep.subr.mxu0 0.0
    %1118 = vmatpush1.msra.mxu0 0.0
    %1119 = vmatprep.subr.mxu0 0.0
    %1120 = vmatpush1.msra.mxu0 0.0
    %1121 = vmatprep.subr.mxu0 0.0
    %1122 = vmatpush1.msra.mxu0 0.0
    %1123 = vmatprep.subr.mxu0 0.0
    %1124 = vmatpush1.msra.mxu0 0.0
    %1125 = vmatprep.subr.mxu0 0.0
    %1126 = vmatpush1.msra.mxu0 0.0
    %1127 = vmatprep.subr.mxu0 0.0
    %1128 = vmatpush1.msra.mxu0 0.0
    %1129 = vmatprep.mubr.f32.mxu0 0.0
    %1130 = vmatmul.mubr.f32.gmra.mrb[0].mxu0 %v988
    %v1131 = vpop.f32.mrb[0].mxu0
    %v1132 = vadd.f32 0.0, %v1131
    %v1133 = vpop.f32.mrb[0].mxu0
    %v1134 = vadd.f32 0.0, %v1133
    %1135 = vdwg.mxu0
    %v1136 = vadd.f32 %v990, %v1061
    %v1137 = vadd.f32 %v991, %v1063
    %v1138 = vadd.f32 %v992, %v1132
    %v1139 = vadd.f32 %v993, %v1134
    %v1140 = vxor.u32 %v1136, 2147483648
    %v1141 = vmul.f32 %v1140, 1.442695
    %v1142 = vpow.pop %v1141
    %v1143 = vadd.f32 %v1142, 1.0
    %v1144 = vrcp.pop %v1143
    %v1145 = vmul.f32 1.0, %v1144
    %v1146 = vxor.u32 %v1137, 2147483648
    %v1147 = vmul.f32 %v1146, 1.442695
    %v1148 = vpow.pop %v1147
    %v1149 = vadd.f32 %v1148, 1.0
    %v1150 = vrcp.pop %v1149
    %v1151 = vmul.f32 1.0, %v1150
    %v1152 = vtanh.pop %v1138
    %v1153 = vxor.u32 %v1139, 2147483648
    %v1154 = vmul.f32 %v1153, 1.442695
    %v1155 = vpow.pop %v1154
    %v1156 = vadd.f32 %v1155, 1.0
    %v1157 = vrcp.pop %v1156
    %v1158 = vmul.f32 1.0, %v1157
    %v1159 = vmul.f32 %v1151, %v986
    %v1160 = vmul.f32 %v1145, %v1152
    %v1161 = vadd.f32 %v1159, %v1160
    %v1162 = vtanh.pop %v1161
    %v1163 = vmul.f32 %v1158, %v1162
    %s1164 = scalar_lea.vmem [#allocation4], 192
    %v1165 = vld [vmem:[%s1164] sm:$0xff]
    %v1166 = vld [vmem:[%s1164 + $0x8] sm:$0xff]
    %v1167 = vld [vmem:[%s1164 + $0x10] sm:$0xff]
    %v1168 = vld [vmem:[%s1164 + $0x18] sm:$0xff]
    %1169 = vmatprep.subr.mxu0 %v50
    %1170 = vmatpush1.msra.mxu0 %v49
    %1171 = vmatprep.subr.mxu0 %v54
    %1172 = vmatpush1.msra.mxu0 %v53
    %1173 = vmatprep.subr.mxu0 %v58
    %1174 = vmatpush1.msra.mxu0 %v57
    %1175 = vmatprep.subr.mxu0 %v62
    %1176 = vmatpush1.msra.mxu0 %v61
    %1177 = vmatprep.subr.mxu0 %v66
    %1178 = vmatpush1.msra.mxu0 %v65
    %1179 = vmatprep.subr.mxu0 %v70
    %1180 = vmatpush1.msra.mxu0 %v69
    %1181 = vmatprep.subr.mxu0 %v74
    %1182 = vmatpush1.msra.mxu0 %v73
    %1183 = vmatprep.subr.mxu0 %v78
    %1184 = vmatpush1.msra.mxu0 %v77
    %1185 = vmatprep.subr.mxu0 %v82
    %1186 = vmatpush1.msra.mxu0 %v81
    %1187 = vmatprep.subr.mxu0 %v86
    %1188 = vmatpush1.msra.mxu0 %v85
    %1189 = vmatprep.subr.mxu0 %v90
    %1190 = vmatpush1.msra.mxu0 %v89
    %1191 = vmatprep.subr.mxu0 %v94
    %1192 = vmatpush1.msra.mxu0 %v93
    %1193 = vmatprep.subr.mxu0 %v98
    %1194 = vmatpush1.msra.mxu0 %v97
    %1195 = vmatprep.subr.mxu0 %v102
    %1196 = vmatpush1.msra.mxu0 %v101
    %1197 = vmatprep.subr.mxu0 %v106
    %1198 = vmatpush1.msra.mxu0 %v105
    %1199 = vmatprep.subr.mxu0 %v110
    %1200 = vmatpush1.msra.mxu0 %v109
    %1201 = vmatprep.subr.mxu0 0.0
    %1202 = vmatpush1.msra.mxu0 0.0
    %1203 = vmatprep.subr.mxu0 0.0
    %1204 = vmatpush1.msra.mxu0 0.0
    %1205 = vmatprep.subr.mxu0 0.0
    %1206 = vmatpush1.msra.mxu0 0.0
    %1207 = vmatprep.subr.mxu0 0.0
    %1208 = vmatpush1.msra.mxu0 0.0
    %1209 = vmatprep.subr.mxu0 0.0
    %1210 = vmatpush1.msra.mxu0 0.0
    %1211 = vmatprep.subr.mxu0 0.0
    %1212 = vmatpush1.msra.mxu0 0.0
    %1213 = vmatprep.subr.mxu0 0.0
    %1214 = vmatpush1.msra.mxu0 0.0
    %1215 = vmatprep.subr.mxu0 0.0
    %1216 = vmatpush1.msra.mxu0 0.0
    %1217 = vmatprep.subr.mxu0 0.0
    %1218 = vmatpush1.msra.mxu0 0.0
    %1219 = vmatprep.subr.mxu0 0.0
    %1220 = vmatpush1.msra.mxu0 0.0
    %1221 = vmatprep.subr.mxu0 0.0
    %1222 = vmatpush1.msra.mxu0 0.0
    %1223 = vmatprep.subr.mxu0 0.0
    %1224 = vmatpush1.msra.mxu0 0.0
    %1225 = vmatprep.subr.mxu0 0.0
    %1226 = vmatpush1.msra.mxu0 0.0
    %1227 = vmatprep.subr.mxu0 0.0
    %1228 = vmatpush1.msra.mxu0 0.0
    %1229 = vmatprep.subr.mxu0 0.0
    %1230 = vmatpush1.msra.mxu0 0.0
    %1231 = vmatprep.subr.mxu0 0.0
    %1232 = vmatpush1.msra.mxu0 0.0
    %1233 = vmatprep.mubr.f32.mxu0 0.0
    %1234 = vmatmul.mubr.f32.gmra.mrb[0].mxu0 %v1163
    %v1235 = vpop.f32.mrb[0].mxu0
    %v1236 = vadd.f32 0.0, %v1235
    %v1237 = vpop.f32.mrb[0].mxu0
    %v1238 = vadd.f32 0.0, %v1237
    %1239 = vdwg.mxu0
    %1240 = vmatprep.subr.mxu0 %v52
    %1241 = vmatpush1.msra.mxu0 %v51
    %1242 = vmatprep.subr.mxu0 %v56
    %1243 = vmatpush1.msra.mxu0 %v55
    %1244 = vmatprep.subr.mxu0 %v60
    %1245 = vmatpush1.msra.mxu0 %v59
    %1246 = vmatprep.subr.mxu0 %v64
    %1247 = vmatpush1.msra.mxu0 %v63
    %1248 = vmatprep.subr.mxu0 %v68
    %1249 = vmatpush1.msra.mxu0 %v67
    %1250 = vmatprep.subr.mxu0 %v72
    %1251 = vmatpush1.msra.mxu0 %v71
    %1252 = vmatprep.subr.mxu0 %v76
    %1253 = vmatpush1.msra.mxu0 %v75
    %1254 = vmatprep.subr.mxu0 %v80
    %1255 = vmatpush1.msra.mxu0 %v79
    %1256 = vmatprep.subr.mxu0 %v84
    %1257 = vmatpush1.msra.mxu0 %v83
    %1258 = vmatprep.subr.mxu0 %v88
    %1259 = vmatpush1.msra.mxu0 %v87
    %1260 = vmatprep.subr.mxu0 %v92
    %1261 = vmatpush1.msra.mxu0 %v91
    %1262 = vmatprep.subr.mxu0 %v96
    %1263 = vmatpush1.msra.mxu0 %v95
    %1264 = vmatprep.subr.mxu0 %v100
    %1265 = vmatpush1.msra.mxu0 %v99
    %1266 = vmatprep.subr.mxu0 %v104
    %1267 = vmatpush1.msra.mxu0 %v103
    %1268 = vmatprep.subr.mxu0 %v108
    %1269 = vmatpush1.msra.mxu0 %v107
    %1270 = vmatprep.subr.mxu0 %v112
    %1271 = vmatpush1.msra.mxu0 %v111
    %1272 = vmatprep.subr.mxu0 0.0
    %1273 = vmatpush1.msra.mxu0 0.0
    %1274 = vmatprep.subr.mxu0 0.0
    %1275 = vmatpush1.msra.mxu0 0.0
    %1276 = vmatprep.subr.mxu0 0.0
    %1277 = vmatpush1.msra.mxu0 0.0
    %1278 = vmatprep.subr.mxu0 0.0
    %1279 = vmatpush1.msra.mxu0 0.0
    %1280 = vmatprep.subr.mxu0 0.0
    %1281 = vmatpush1.msra.mxu0 0.0
    %1282 = vmatprep.subr.mxu0 0.0
    %1283 = vmatpush1.msra.mxu0 0.0
    %1284 = vmatprep.subr.mxu0 0.0
    %1285 = vmatpush1.msra.mxu0 0.0
    %1286 = vmatprep.subr.mxu0 0.0
    %1287 = vmatpush1.msra.mxu0 0.0
    %1288 = vmatprep.subr.mxu0 0.0
    %1289 = vmatpush1.msra.mxu0 0.0
    %1290 = vmatprep.subr.mxu0 0.0
    %1291 = vmatpush1.msra.mxu0 0.0
    %1292 = vmatprep.subr.mxu0 0.0
    %1293 = vmatpush1.msra.mxu0 0.0
    %1294 = vmatprep.subr.mxu0 0.0
    %1295 = vmatpush1.msra.mxu0 0.0
    %1296 = vmatprep.subr.mxu0 0.0
    %1297 = vmatpush1.msra.mxu0 0.0
    %1298 = vmatprep.subr.mxu0 0.0
    %1299 = vmatpush1.msra.mxu0 0.0
    %1300 = vmatprep.subr.mxu0 0.0
    %1301 = vmatpush1.msra.mxu0 0.0
    %1302 = vmatprep.subr.mxu0 0.0
    %1303 = vmatpush1.msra.mxu0 0.0
    %1304 = vmatprep.mubr.f32.mxu0 0.0
    %1305 = vmatmul.mubr.f32.gmra.mrb[0].mxu0 %v1163
    %v1306 = vpop.f32.mrb[0].mxu0
    %v1307 = vadd.f32 0.0, %v1306
    %v1308 = vpop.f32.mrb[0].mxu0
    %v1309 = vadd.f32 0.0, %v1308
    %1310 = vdwg.mxu0
    %v1311 = vadd.f32 %v1165, %v1236
    %v1312 = vadd.f32 %v1166, %v1238
    %v1313 = vadd.f32 %v1167, %v1307
    %v1314 = vadd.f32 %v1168, %v1309
    %v1315 = vxor.u32 %v1311, 2147483648
    %v1316 = vmul.f32 %v1315, 1.442695
    %v1317 = vpow.pop %v1316
    %v1318 = vadd.f32 %v1317, 1.0
    %v1319 = vrcp.pop %v1318
    %v1320 = vmul.f32 1.0, %v1319
    %v1321 = vxor.u32 %v1312, 2147483648
    %v1322 = vmul.f32 %v1321, 1.442695
    %v1323 = vpow.pop %v1322
    %v1324 = vadd.f32 %v1323, 1.0
    %v1325 = vrcp.pop %v1324
    %v1326 = vmul.f32 1.0, %v1325
    %v1327 = vtanh.pop %v1313
    %v1328 = vxor.u32 %v1314, 2147483648
    %v1329 = vmul.f32 %v1328, 1.442695
    %v1330 = vpow.pop %v1329
    %v1331 = vadd.f32 %v1330, 1.0
    %v1332 = vrcp.pop %v1331
    %v1333 = vmul.f32 1.0, %v1332
    %v1334 = vmul.f32 %v1326, %v1161
    %v1335 = vmul.f32 %v1320, %v1327
    %v1336 = vadd.f32 %v1334, %v1335
    %v1337 = vtanh.pop %v1336
    %v1338 = vmul.f32 %v1333, %v1337
    %s1339 = scalar_lea.vmem [#allocation4], 224
    %v1340 = vld [vmem:[%s1339] sm:$0xff]
    %v1341 = vld [vmem:[%s1339 + $0x8] sm:$0xff]
    %v1342 = vld [vmem:[%s1339 + $0x10] sm:$0xff]
    %v1343 = vld [vmem:[%s1339 + $0x18] sm:$0xff]
    %1344 = vmatprep.subr.mxu0 %v50
    %1345 = vmatpush1.msra.mxu0 %v49
    %1346 = vmatprep.subr.mxu0 %v54
    %1347 = vmatpush1.msra.mxu0 %v53
    %1348 = vmatprep.subr.mxu0 %v58
    %1349 = vmatpush1.msra.mxu0 %v57
    %1350 = vmatprep.subr.mxu0 %v62
    %1351 = vmatpush1.msra.mxu0 %v61
    %1352 = vmatprep.subr.mxu0 %v66
    %1353 = vmatpush1.msra.mxu0 %v65
    %1354 = vmatprep.subr.mxu0 %v70
    %1355 = vmatpush1.msra.mxu0 %v69
    %1356 = vmatprep.subr.mxu0 %v74
    %1357 = vmatpush1.msra.mxu0 %v73
    %1358 = vmatprep.subr.mxu0 %v78
    %1359 = vmatpush1.msra.mxu0 %v77
    %1360 = vmatprep.subr.mxu0 %v82
    %1361 = vmatpush1.msra.mxu0 %v81
    %1362 = vmatprep.subr.mxu0 %v86
    %1363 = vmatpush1.msra.mxu0 %v85
    %1364 = vmatprep.subr.mxu0 %v90
    %1365 = vmatpush1.msra.mxu0 %v89
    %1366 = vmatprep.subr.mxu0 %v94
    %1367 = vmatpush1.msra.mxu0 %v93
    %1368 = vmatprep.subr.mxu0 %v98
    %1369 = vmatpush1.msra.mxu0 %v97
    %1370 = vmatprep.subr.mxu0 %v102
    %1371 = vmatpush1.msra.mxu0 %v101
    %1372 = vmatprep.subr.mxu0 %v106
    %1373 = vmatpush1.msra.mxu0 %v105
    %1374 = vmatprep.subr.mxu0 %v110
    %1375 = vmatpush1.msra.mxu0 %v109
    %1376 = vmatprep.subr.mxu0 0.0
    %1377 = vmatpush1.msra.mxu0 0.0
    %1378 = vmatprep.subr.mxu0 0.0
    %1379 = vmatpush1.msra.mxu0 0.0
    %1380 = vmatprep.subr.mxu0 0.0
    %1381 = vmatpush1.msra.mxu0 0.0
    %1382 = vmatprep.subr.mxu0 0.0
    %1383 = vmatpush1.msra.mxu0 0.0
    %1384 = vmatprep.subr.mxu0 0.0
    %1385 = vmatpush1.msra.mxu0 0.0
    %1386 = vmatprep.subr.mxu0 0.0
    %1387 = vmatpush1.msra.mxu0 0.0
    %1388 = vmatprep.subr.mxu0 0.0
    %1389 = vmatpush1.msra.mxu0 0.0
    %1390 = vmatprep.subr.mxu0 0.0
    %1391 = vmatpush1.msra.mxu0 0.0
    %1392 = vmatprep.subr.mxu0 0.0
    %1393 = vmatpush1.msra.mxu0 0.0
    %1394 = vmatprep.subr.mxu0 0.0
    %1395 = vmatpush1.msra.mxu0 0.0
    %1396 = vmatprep.subr.mxu0 0.0
    %1397 = vmatpush1.msra.mxu0 0.0
    %1398 = vmatprep.subr.mxu0 0.0
    %1399 = vmatpush1.msra.mxu0 0.0
    %1400 = vmatprep.subr.mxu0 0.0
    %1401 = vmatpush1.msra.mxu0 0.0
    %1402 = vmatprep.subr.mxu0 0.0
    %1403 = vmatpush1.msra.mxu0 0.0
    %1404 = vmatprep.subr.mxu0 0.0
    %1405 = vmatpush1.msra.mxu0 0.0
    %1406 = vmatprep.subr.mxu0 0.0
    %1407 = vmatpush1.msra.mxu0 0.0
    %1408 = vmatprep.mubr.f32.mxu0 0.0
    %1409 = vmatmul.mubr.f32.gmra.mrb[0].mxu0 %v1338
    %v1410 = vpop.f32.mrb[0].mxu0
    %v1411 = vadd.f32 0.0, %v1410
    %v1412 = vpop.f32.mrb[0].mxu0
    %v1413 = vadd.f32 0.0, %v1412
    %1414 = vdwg.mxu0
    %1415 = vmatprep.subr.mxu0 %v52
    %1416 = vmatpush1.msra.mxu0 %v51
    %1417 = vmatprep.subr.mxu0 %v56
    %1418 = vmatpush1.msra.mxu0 %v55
    %1419 = vmatprep.subr.mxu0 %v60
    %1420 = vmatpush1.msra.mxu0 %v59
    %1421 = vmatprep.subr.mxu0 %v64
    %1422 = vmatpush1.msra.mxu0 %v63
    %1423 = vmatprep.subr.mxu0 %v68
    %1424 = vmatpush1.msra.mxu0 %v67
    %1425 = vmatprep.subr.mxu0 %v72
    %1426 = vmatpush1.msra.mxu0 %v71
    %1427 = vmatprep.subr.mxu0 %v76
    %1428 = vmatpush1.msra.mxu0 %v75
    %1429 = vmatprep.subr.mxu0 %v80
    %1430 = vmatpush1.msra.mxu0 %v79
    %1431 = vmatprep.subr.mxu0 %v84
    %1432 = vmatpush1.msra.mxu0 %v83
    %1433 = vmatprep.subr.mxu0 %v88
    %1434 = vmatpush1.msra.mxu0 %v87
    %1435 = vmatprep.subr.mxu0 %v92
    %1436 = vmatpush1.msra.mxu0 %v91
    %1437 = vmatprep.subr.mxu0 %v96
    %1438 = vmatpush1.msra.mxu0 %v95
    %1439 = vmatprep.subr.mxu0 %v100
    %1440 = vmatpush1.msra.mxu0 %v99
    %1441 = vmatprep.subr.mxu0 %v104
    %1442 = vmatpush1.msra.mxu0 %v103
    %1443 = vmatprep.subr.mxu0 %v108
    %1444 = vmatpush1.msra.mxu0 %v107
    %1445 = vmatprep.subr.mxu0 %v112
    %1446 = vmatpush1.msra.mxu0 %v111
    %1447 = vmatprep.subr.mxu0 0.0
    %1448 = vmatpush1.msra.mxu0 0.0
    %1449 = vmatprep.subr.mxu0 0.0
    %1450 = vmatpush1.msra.mxu0 0.0
    %1451 = vmatprep.subr.mxu0 0.0
    %1452 = vmatpush1.msra.mxu0 0.0
    %1453 = vmatprep.subr.mxu0 0.0
    %1454 = vmatpush1.msra.mxu0 0.0
    %1455 = vmatprep.subr.mxu0 0.0
    %1456 = vmatpush1.msra.mxu0 0.0
    %1457 = vmatprep.subr.mxu0 0.0
    %1458 = vmatpush1.msra.mxu0 0.0
    %1459 = vmatprep.subr.mxu0 0.0
    %1460 = vmatpush1.msra.mxu0 0.0
    %1461 = vmatprep.subr.mxu0 0.0
    %1462 = vmatpush1.msra.mxu0 0.0
    %1463 = vmatprep.subr.mxu0 0.0
    %1464 = vmatpush1.msra.mxu0 0.0
    %1465 = vmatprep.subr.mxu0 0.0
    %1466 = vmatpush1.msra.mxu0 0.0
    %1467 = vmatprep.subr.mxu0 0.0
    %1468 = vmatpush1.msra.mxu0 0.0
    %1469 = vmatprep.subr.mxu0 0.0
    %1470 = vmatpush1.msra.mxu0 0.0
    %1471 = vmatprep.subr.mxu0 0.0
    %1472 = vmatpush1.msra.mxu0 0.0
    %1473 = vmatprep.subr.mxu0 0.0
    %1474 = vmatpush1.msra.mxu0 0.0
    %1475 = vmatprep.subr.mxu0 0.0
    %1476 = vmatpush1.msra.mxu0 0.0
    %1477 = vmatprep.subr.mxu0 0.0
    %1478 = vmatpush1.msra.mxu0 0.0
    %1479 = vmatprep.mubr.f32.mxu0 0.0
    %1480 = vmatmul.mubr.f32.gmra.mrb[0].mxu0 %v1338
    %v1481 = vpop.f32.mrb[0].mxu0
    %v1482 = vadd.f32 0.0, %v1481
    %v1483 = vpop.f32.mrb[0].mxu0
    %v1484 = vadd.f32 0.0, %v1483
    %1485 = vdwg.mxu0
    %v1486 = vadd.f32 %v1340, %v1411
    %v1487 = vadd.f32 %v1341, %v1413
    %v1488 = vadd.f32 %v1342, %v1482
    %v1489 = vadd.f32 %v1343, %v1484
    %v1490 = vxor.u32 %v1486, 2147483648
    %v1491 = vmul.f32 %v1490, 1.442695
    %v1492 = vpow.pop %v1491
    %v1493 = vadd.f32 %v1492, 1.0
    %v1494 = vrcp.pop %v1493
    %v1495 = vmul.f32 1.0, %v1494
    %v1496 = vxor.u32 %v1487, 2147483648
    %v1497 = vmul.f32 %v1496, 1.442695
    %v1498 = vpow.pop %v1497
    %v1499 = vadd.f32 %v1498, 1.0
    %v1500 = vrcp.pop %v1499
    %v1501 = vmul.f32 1.0, %v1500
    %v1502 = vtanh.pop %v1488
    %v1503 = vxor.u32 %v1489, 2147483648
    %v1504 = vmul.f32 %v1503, 1.442695
    %v1505 = vpow.pop %v1504
    %v1506 = vadd.f32 %v1505, 1.0
    %v1507 = vrcp.pop %v1506
    %v1508 = vmul.f32 1.0, %v1507
    %v1509 = vmul.f32 %v1501, %v1336
    %v1510 = vmul.f32 %v1495, %v1502
    %v1511 = vadd.f32 %v1509, %v1510
    %v1512 = vtanh.pop %v1511
    %v1513 = vmul.f32 %v1508, %v1512
    %1514 = vst [vmem:[#allocation2] sm:$0xff] %v1513
    %1515 = vst [vmem:[#allocation3] sm:$0xff] %v1511
    // Predicated region
    $region22: #{tpu_custom_call.1} parent=1 // pred_check
      %p1516 = pneg %p43
    $region23: #{tpu_custom_call.1} parent=1 // pred_check_branch
      %1518 = sbr.rel (%p1516) target = $region25
    $region24: #{tpu_custom_call.1} parent=1 // pred_region
      %1519 = vst [vmem:[#allocation9] sm:$0xff] %v1513
      %1520 = vst [vmem:[#allocation10] sm:$0xff] %v1511
    $region25: #{tpu_custom_call.1} parent=1 // pred_fallthru
      _
    // Predicated region
    $region26: #{tpu_custom_call.1} parent=1 // pred_check
      _
    $region27: #{tpu_custom_call.1} parent=1 // pred_check_branch
      %1522 = sbr.rel (0) target = $region29
    $region28: #{tpu_custom_call.1} parent=1 // pred_region
      %s1524 = ssub.s32 128, 128
      %1525 = vsyncadd [#allocation6], %s1524
      %s1527 = sshll.u32 [#allocation9], 4
      %s1528 = int_to_ptr.vmem [resolvable:$true] %s1527
      %1530 = dma.vmem_to_hbm [thread:$0]  %s1528, 128, %s2, [#allocation6]
    $region29: #{tpu_custom_call.1} parent=1 // pred_fallthru
      _
    // Predicated region
    $region30: #{tpu_custom_call.1} parent=1 // pred_check
      _
    $region31: #{tpu_custom_call.1} parent=1 // pred_check_branch
      %1532 = sbr.rel (0) target = $region33
    $region32: #{tpu_custom_call.1} parent=1 // pred_region
      %s1534 = ssub.s32 128, 128
      %1535 = vsyncadd [#allocation11], %s1534
      %s1537 = sshll.u32 [#allocation10], 4
      %s1538 = int_to_ptr.vmem [resolvable:$true] %s1537
      %1540 = dma.vmem_to_hbm [thread:$0]  %s1538, 128, %s3, [#allocation11]
    $region33: #{tpu_custom_call.1} parent=1 // pred_fallthru
      _
    // Predicated region
    $region34: #{tpu_custom_call.1} parent=1 // pred_check
      _
    $region35: #{tpu_custom_call.1} parent=1 // pred_check_branch
      %1542 = sbr.rel (0) target = $region37
    $region36: #{tpu_custom_call.1} parent=1 // pred_region
      %1543 = dma.done [#allocation6], 128
    $region37: #{tpu_custom_call.1} parent=1 // pred_fallthru
      _
    // Predicated region
    $region38: #{tpu_custom_call.1} parent=1 // pred_check
      _
    $region39: #{tpu_custom_call.1} parent=1 // pred_check_branch
      %1545 = sbr.rel (0) target = $region41
    $region40: #{tpu_custom_call.1} parent=1 // pred_region
      %1546 = dma.done [#allocation11], 128
    $region41: #{tpu_custom_call.1} parent=1 // pred_fallthru
      _
    %1547 = vsyncpa [#allocation5], 1
    %1548 = vsyncpa [#allocation8], 1
    %1549 = vsyncpa [#allocation6], 1
    %1550 = vsyncpa [#allocation11], 1

</llo_original>
